<compile_context>
chip_gen: v7x
topology: tpu7x:2x2x1
jax: 0.10.0
libtpu: 0.0.40
codegen_flags: <defaults>
</compile_context>

<pallas_src>
import functools

import jax
import jax.numpy as jnp
from jax import lax
from jax.experimental import pallas as pl
from jax.experimental.pallas import tpu as pltpu


# ---------------------------------------------------------------------------
# Generation-aware VMEM budget + tile-size helpers
# ---------------------------------------------------------------------------
def _vmem_limit_bytes():
    """~75% of physical VMEM (v6e: ~96 MiB, v7x: ~48 MiB), conservative fallback."""
    try:
        cap = pltpu.get_tpu_info().vmem_capacity_bytes
    except Exception:
        cap = 64 * 1024 * 1024  # assume the smallest (v7x-sized) VMEM
    return min(int(cap) * 3 // 4, 96 * 1024 * 1024)


def _divisor_tiles(total, unit):
    """Divisors of `total` that are multiples of `unit`, descending (always
    includes `total` itself, which is valid as a full-extent block)."""
    cands = [t for t in range(unit, total + 1, unit) if total % t == 0]
    cands.append(total)
    return sorted(set(cands), reverse=True)


# ---------------------------------------------------------------------------
# Kernel 1: fused embedding gather + projection + masked avg pool + L2 norm
# ---------------------------------------------------------------------------
def _encode_pool_kernel(ids_ref, emb_ref, mask_ref, w_ref, b_ref, out_ref,
                        hbuf, sems, *, n_tile, seq_len):
    i = pl.program_id(0)
    num_tiles = pl.num_programs(0)
    ntok = n_tile * seq_len
    d = out_ref.shape[-1]

    # --- Gather helpers: one (1, D) row DMA per token, shared sem per slot. ---
    # In-flight DMAs are bounded by ntok (tile picker keeps ntok <= ~512).
    # TODO(synk): for very long L, chunk the issue loop (ring of 8-16 sems) to
    # keep the outstanding-DMA count within the hardware queue depth.
    def issue_gather(tile_idx, slot):
        base_tok = tile_idx * ntok
        base_row = slot * ntok

        @pl.loop(0, ntok)
        def _(t):
            tid = ids_ref[base_tok + t]                       # SMEM scalar read
            pltpu.make_async_copy(emb_ref.at[pl.ds(tid, 1)],
                                  hbuf.at[pl.ds(base_row + t, 1)],
                                  sems.at[slot]).start()

    def wait_gather(slot):
        base_row = slot * ntok

        @pl.loop(0, ntok)
        def _(t):
            # Wait only needs the semaphore + transfer size; dst matches start.
            pltpu.make_async_copy(emb_ref.at[pl.ds(0, 1)],
                                  hbuf.at[pl.ds(base_row + t, 1)],
                                  sems.at[slot]).wait()

    # Prime slot 0 with tile 0 on the first grid step.
    @pl.when(i == 0)
    def _():
        issue_gather(0, 0)

    # Prefetch tile i+1 into the other slot so its gather overlaps tile i's
    # compute (grid runs sequentially -> "arbitrary" semantics in the wrapper).
    @pl.when(i + 1 < num_tiles)
    def _():
        issue_gather(i + 1, (i + 1) & 1)

    slot = i & 1
    wait_gather(slot)

    base = pl.multiple_of(slot * ntok, 8)
    h = hbuf[pl.ds(base, ntok), :]                            # [ntok, D] f32
    # TODO(synk): store the embedding table in bf16 (u32-packed row DMAs) to
    # halve gather bytes; kept f32 here so single-row DMAs stay tile-aligned.

    # --- Projection head: bf16 operands on the MXU, f32 accumulation. ---
    proj = jnp.tanh(
        jnp.dot(h.astype(jnp.bfloat16), w_ref[...],
                preferred_element_type=jnp.float32)
        + b_ref[...])                                         # [ntok, D] f32

    proj = proj.reshape(n_tile, seq_len, d)

    # --- Masked average pooling (pool_type='avg'). ---
    mask = mask_ref[...].astype(jnp.float32)                  # [n_tile, L]
    summed = jnp.sum(proj * mask[:, :, None], axis=1)         # [n_tile, D]
    denom = jnp.maximum(jnp.sum(mask, axis=1, keepdims=True), 1.0)
    pooled = summed * pl.reciprocal(denom, approx=True)       # EUP divide

    # --- L2 normalize (F.normalize, eps=1e-12) via EUP rsqrt. ---
    sq = jnp.sum(pooled * pooled, axis=-1, keepdims=True)
    out_ref[...] = pooled * lax.rsqrt(jnp.maximum(sq, 1e-24))


def encode_pool(emb, input_ids, attention_mask, w, b, *,
                n_tile=None, target_rows=512, vmem_limit_bytes=None):
    """Embeds every sequence: [N, L] ids -> [N, D] L2-normalized reps."""
    n, l = input_ids.shape
    _, d = emb.shape
    if vmem_limit_bytes is None:
        vmem_limit_bytes = _vmem_limit_bytes()

    if n_tile is None:
        budget = int(vmem_limit_bytes * 0.6)
        cands = _divisor_tiles(n, 8)
        n_tile = cands[-1]                                   # smallest fallback
        for cand in cands:                                   # descending
            ntok = cand * l
            need = (2 * ntok * d * 4                         # hbuf (2 slots, f32)
                    + 2 * d * d * 2                          # W (bf16, 2 bufs)
                    + 2 * d * 4                              # bias
                    + 2 * cand * l * 4                       # mask blocks
                    + 2 * cand * d * 4)                      # output blocks
            if ntok <= max(target_rows, l) and need <= budget:
                n_tile = cand
                break
    assert n % n_tile == 0

    ids_flat = input_ids.reshape(-1).astype(jnp.int32)       # flat -> no SMEM 2D padding
    w_bf = w.astype(jnp.bfloat16)                            # cast once, not per step

    # TODO(synk): mark the resident W / bias blocks pipeline_mode=pl.Buffered(1)
    # to reclaim their second buffer at real D.
    kernel = functools.partial(_encode_pool_kernel, n_tile=n_tile, seq_len=l)
    return pl.pallas_call(
        kernel,
        out_shape=jax.ShapeDtypeStruct((n, d), jnp.float32),
        grid_spec=pltpu.PrefetchScalarGridSpec(
            num_scalar_prefetch=1,                            # flat ids -> SMEM
            grid=(n // n_tile,),
            in_specs=[
                pl.BlockSpec(memory_space=pl.ANY),                   # emb stays in HBM
                pl.BlockSpec((n_tile, l), lambda i, ids: (i, 0)),    # mask tile
                pl.BlockSpec((d, d), lambda i, ids: (0, 0)),         # W (resident)
                pl.BlockSpec((1, d), lambda i, ids: (0, 0)),         # bias (resident)
            ],
            out_specs=pl.BlockSpec((n_tile, d), lambda i, ids: (i, 0)),
            scratch_shapes=[
                pltpu.VMEM((2 * n_tile * l, d), jnp.float32),        # 2-slot gather buf
                pltpu.SemaphoreType.DMA((2,)),                       # one sem per slot
            ]),
        compiler_params=pltpu.CompilerParams(
            # cross-step manual DMA prefetch -> grid must execute in order
            dimension_semantics=("arbitrary",),
            vmem_limit_bytes=vmem_limit_bytes),
    )(ids_flat, emb, attention_mask, w_bf, b)


# ---------------------------------------------------------------------------
# Kernel 2: fused contrastive scores (q . p / t) + per-row cross-entropy terms
# ---------------------------------------------------------------------------
def _scores_ce_kernel(q_ref, p_ref, scores_ref, rowloss_ref, *,
                      inv_t, n_psg, b_tile, n_valid):
    i = pl.program_id(0)

    # Contract on D of both operands (q [b_tile, D] x p [P_pad, D]) -> no HBM
    # transpose of p, lane-dense output on the padded passage axis.
    s = lax.dot_general(q_ref[...], p_ref[...],
                        dimension_numbers=(((1,), (1,)), ((), ())),
                        preferred_element_type=jnp.float32) * inv_t
    scores_ref[...] = s                                        # [b_tile, P_pad]

    row = lax.broadcasted_iota(jnp.int32, s.shape, 0)
    col = lax.broadcasted_iota(jnp.int32, s.shape, 1)
    label_col = (i * b_tile + row) * n_psg                     # labels[r] = r*n_psg
    valid = col < n_valid                                      # mask padded columns

    s_m = jnp.where(valid, s, -jnp.inf)
    m = jnp.max(s_m, axis=-1, keepdims=True)
    lse = jnp.log(jnp.sum(jnp.exp(s_m - m), axis=-1, keepdims=True)) + m
    picked = jnp.sum(jnp.where(col == label_col, s, 0.0), axis=-1, keepdims=True)
    rowloss_ref[...] = lse - picked                            # per-row CE term


def scores_and_ce(q_reps, p_reps, *, inv_t, n_psg,
                  b_tile=None, vmem_limit_bytes=None):
    b, d = q_reps.shape
    p = p_reps.shape[0]
    if vmem_limit_bytes is None:
        vmem_limit_bytes = _vmem_limit_bytes()

    p_pad = ((p + 127) // 128) * 128                           # lane-dense scores

    if b_tile is None:
        budget = int(vmem_limit_bytes * 0.6)
        cands = _divisor_tiles(b, 8)
        b_tile = cands[-1]
        for cand in cands:
            need = (2 * cand * d * 2                           # q tiles (bf16)
                    + 2 * p_pad * d * 2                        # p (bf16, 2 bufs)
                    + 2 * cand * p_pad * 4                     # score tiles
                    + 2 * cand * 4)                            # row-loss tiles
            if cand <= 256 and need <= budget:
                b_tile = cand
                break
    assert b % b_tile == 0

    # bf16 operands (full MXU rate, half VMEM); reps are L2-normalized so safe.
    q_bf = q_reps.astype(jnp.bfloat16)
    p_bf = jnp.pad(p_reps, ((0, p_pad - p), (0, 0))).astype(jnp.bfloat16)

    kernel = functools.partial(_scores_ce_kernel, inv_t=float(inv_t),
                               n_psg=n_psg, b_tile=b_tile, n_valid=p)
    scores, rowloss = pl.pallas_call(
        kernel,
        out_shape=(jax.ShapeDtypeStruct((b, p_pad), jnp.float32),
                   jax.ShapeDtypeStruct((b, 1), jnp.float32)),
        grid_spec=pltpu.PrefetchScalarGridSpec(
            num_scalar_prefetch=0,
            grid=(b // b_tile,),
            in_specs=[pl.BlockSpec((b_tile, d), lambda i: (i, 0)),
                      pl.BlockSpec((p_pad, d), lambda i: (0, 0))],
            out_specs=(pl.BlockSpec((b_tile, p_pad), lambda i: (i, 0)),
                       pl.BlockSpec((b_tile, 1), lambda i: (i, 0)))),
        compiler_params=pltpu.CompilerParams(
            # per-tile partial loss -> no cross-step state -> v7x can split TCs
            dimension_semantics=("parallel",),
            vmem_limit_bytes=vmem_limit_bytes),
    )(q_bf, p_bf)
    return scores, rowloss


# ---------------------------------------------------------------------------
# BiencoderModel.forward equivalent (world_size=1, process_index=0, no KD)
# ---------------------------------------------------------------------------
def biencoder_forward(params, input_ids, attention_mask, *, n_psg, t,
                      l2_normalize=True):
    # TODO(synk): multi-process dist_gather_tensor, the KD (KLDiv) branch and
    # full_contrastive_loss=True pairing are not implemented (single device,
    # do_kd_biencoder=False); the HF encoder is a single projection head.
    embeds = encode_pool(params["emb"], input_ids, attention_mask,
                         params["w"], params["b"])             # [N, D]

    n = input_ids.shape[0]
    b = n // (n_psg + 1)
    q_reps = embeds[:b]                                        # [B, D]
    p_reps = embeds[b:]                                        # [B*n_psg, D]

    inv_t = (1.0 / t) if l2_normalize else 1.0
    scores_pad, rowloss = scores_and_ce(q_reps, p_reps, inv_t=inv_t, n_psg=n_psg)
    loss = jnp.mean(rowloss)                                   # CE reduction='mean'
    labels = jnp.arange(b, dtype=jnp.int32) * n_psg

    total_n_psg = b * n_psg                                    # world_size == 1
    return {
        "loss": loss,
        "q_reps": q_reps,
        "p_reps": p_reps,
        "labels": labels,
        "scores": scores_pad[:, :total_n_psg],
    }


# ---------------------------------------------------------------------------
# Pure-JAX reference (for a loose numerical sanity check)
# ---------------------------------------------------------------------------
def _reference(params, input_ids, attention_mask, *, n_psg, t):
    hidden = jnp.take(params["emb"], input_ids, axis=0)
    proj = jnp.tanh(hidden @ params["w"] + params["b"])
    m = attention_mask.astype(jnp.float32)
    pooled = (proj * m[:, :, None]).sum(1) / jnp.maximum(m.sum(1, keepdims=True), 1.0)
    norm = jnp.sqrt(jnp.sum(pooled * pooled, axis=-1, keepdims=True))
    reps = pooled / jnp.maximum(norm, 1e-12)
    b = input_ids.shape[0] // (n_psg + 1)
    q, p = reps[:b], reps[b:]
    scores = (q @ p.T) / t
    labels = jnp.arange(b) * n_psg
    lse = jax.scipy.special.logsumexp(scores, axis=-1)
    loss = jnp.mean(lse - scores[jnp.arange(b), labels])
    return reps, scores, loss


if __name__ == "__main__":
    key = jax.random.PRNGKey(0)
    # Small but tiling-friendly shapes: D multiple of 128 (lane-dense),
    # L multiple of 8 (sublane), B multiple of 8.  N=64, L=16 makes the
    # default tile picker choose n_tile=32 -> 2 grid steps, so the gather
    # prefetch/overlap path is actually exercised.
    B, n_psg, L, D, V = 16, 3, 16, 128, 256
    N = B * (n_psg + 1)                          # 64 sequences total
    t = 0.05                                     # temperature

    k_emb, k_w, k_b, k_ids = jax.random.split(key, 4)
    params = {
        "emb": jax.random.normal(k_emb, (V, D), jnp.float32) * 0.02,
        "w": jax.random.normal(k_w, (D, D), jnp.float32) * 0.1,
        "b": jax.random.normal(k_b, (1, D), jnp.float32) * 0.1,
    }

    input_ids = jax.random.randint(k_ids, (N, L), 0, V, jnp.int32)
    # deterministic padding: odd rows have 2 padded tokens at the end
    pos = jnp.arange(L)[None, :]
    lens = jnp.where(jnp.arange(N)[:, None] % 2 == 1, L - 2, L)
    attention_mask = (pos < lens).astype(jnp.int32)

    out = biencoder_forward(params, input_ids, attention_mask, n_psg=n_psg, t=t)
    jax.block_until_ready(out)

    assert out["q_reps"].shape == (B, D)
    assert out["p_reps"].shape == (B * n_psg, D)
    assert out["scores"].shape == (B, B * n_psg)
    assert out["labels"].shape == (B,)
    assert out["loss"].shape == ()
    assert bool(jnp.isfinite(out["loss"]))
    assert bool(jnp.all(jnp.isfinite(out["scores"])))

    # Loose comparison against the pure-JAX reference (kernels use bf16 MXU
    # operands, so tolerances are generous).
    ref_reps, ref_scores, ref_loss = _reference(
        params, input_ids, attention_mask, n_psg=n_psg, t=t)
    kernel_reps = jnp.concatenate([out["q_reps"], out["p_reps"]], axis=0)
    assert bool(jnp.max(jnp.abs(kernel_reps - ref_reps)) < 2e-2)
    assert bool(jnp.max(jnp.abs(out["scores"] - ref_scores)) < 5e-1)
    assert bool(jnp.abs(out["loss"] - ref_loss) < 5e-1)

    print("KERNEL_OK")
</pallas_src>

<mosaic_0001>
module attributes {stable_mosaic.version = 11 : i64} {
  func.func @_encode_pool_kernel(%arg0: i32, %arg1: memref<1024xi32, #tpu.memory_space<smem>>, %arg2: memref<256x128xf32, #tpu.memory_space<any>>, %arg3: memref<32x16xi32, #tpu.memory_space<vmem>>, %arg4: memref<128x128xbf16, #tpu.memory_space<vmem>>, %arg5: memref<1x128xf32, #tpu.memory_space<vmem>>, %arg6: memref<32x128xf32, #tpu.memory_space<vmem>>, %arg7: memref<1024x128xf32, #tpu.memory_space<vmem>>, %arg8: memref<2x!tpu.dma_semaphore, #tpu.memory_space<semaphore_mem>>) attributes {dimension_semantics = [#tpu.dimension_semantics<arbitrary>], iteration_bounds = array<i64: 2>, scalar_prefetch = 1 : i64, scratch_operands = 2 : i64, tpu.core_type = #tpu.core_type<tc>, window_params = [{}, {transform_indices = @transform_1, window_bounds = array<i64: 32, 16>}, {pipeline_mode = #tpu.pipeline_mode<synchronous>, transform_indices = @transform_2, window_bounds = array<i64: 128, 128>}, {pipeline_mode = #tpu.pipeline_mode<synchronous>, transform_indices = @transform_3, window_bounds = array<i64: 1, 128>}, {transform_indices = @transform_4, window_bounds = array<i64: 32, 128>}]} {
    %c0_i32 = arith.constant 0 : i32
    %0 = arith.cmpi eq, %arg0, %c0_i32 : i32
    %1 = arith.extui %0 : i1 to i32
    %c0_i32_0 = arith.constant 0 : i32
    %2 = arith.cmpi ne, %1, %c0_i32_0 : i32
    scf.if %2 {
      %c0_i32_21 = arith.constant 0 : i32
      %c512_i32_22 = arith.constant 512 : i32
      %44 = arith.addi %c0_i32_21, %c512_i32_22 : i32
      %c1_i32_23 = arith.constant 1 : i32
      scf.for %arg9 = %c0_i32_21 to %44 step %c1_i32_23  : i32 {
        %c1_i32_25 = arith.constant 1 : i32
        %45 = arith.muli %arg9, %c1_i32_25 : i32
        %c0_i32_26 = arith.constant 0 : i32
        %46 = arith.addi %c0_i32_26, %45 : i32
        %c0_i32_27 = arith.constant 0 : i32
        %47 = arith.addi %c0_i32_27, %46 : i32
        %48 = arith.index_cast %47 : i32 to index
        %49 = memref.load %arg1[%48] : memref<1024xi32, #tpu.memory_space<smem>>
        %c0_i32_28 = arith.constant 0 : i32
        %50 = arith.addi %c0_i32_28, %46 : i32
        %c0_i32_29 = arith.constant 0 : i32
        %c0_i32_30 = arith.constant 0 : i32
        %51 = tpu.memref_slice %arg2[%49, %c0_i32_30] : memref<256x128xf32, #tpu.memory_space<any>> -> memref<1x128xf32, #tpu.memory_space<any>>
        %c0_i32_31 = arith.constant 0 : i32
        %52 = tpu.memref_slice %arg7[%50, %c0_i32_31] : memref<1024x128xf32, #tpu.memory_space<vmem>> -> memref<1x128xf32, #tpu.memory_space<vmem>>
        %53 = tpu.memref_slice %arg8[%c0_i32_29] : memref<2x!tpu.dma_semaphore, #tpu.memory_space<semaphore_mem>> -> memref<1x!tpu.dma_semaphore, #tpu.memory_space<semaphore_mem>>
        %54 = tpu.memref_squeeze %53 : memref<1x!tpu.dma_semaphore, #tpu.memory_space<semaphore_mem>> -> memref<!tpu.dma_semaphore, #tpu.memory_space<semaphore_mem>>
        tpu.enqueue_dma source(%51 : memref<1x128xf32, #tpu.memory_space<any>>) target(%52 : memref<1x128xf32, #tpu.memory_space<vmem>>) target_semaphore(%54 : memref<!tpu.dma_semaphore, #tpu.memory_space<semaphore_mem>>)
      }
      %c512_i32_24 = arith.constant 512 : i32
    } else {
    }
    %c1_i32 = arith.constant 1 : i32
    %3 = arith.addi %arg0, %c1_i32 : i32
    %c2_i32 = arith.constant 2 : i32
    %4 = arith.cmpi slt, %3, %c2_i32 : i32
    %5 = arith.extui %4 : i1 to i32
    %c0_i32_1 = arith.constant 0 : i32
    %6 = arith.cmpi ne, %5, %c0_i32_1 : i32
    scf.if %6 {
      %c1_i32_21 = arith.constant 1 : i32
      %44 = arith.addi %arg0, %c1_i32_21 : i32
      %c1_i32_22 = arith.constant 1 : i32
      %45 = arith.addi %arg0, %c1_i32_22 : i32
      %c1_i32_23 = arith.constant 1 : i32
      %46 = arith.andi %45, %c1_i32_23 : i32
      %c512_i32_24 = arith.constant 512 : i32
      %47 = arith.muli %44, %c512_i32_24 : i32
      %c512_i32_25 = arith.constant 512 : i32
      %48 = arith.muli %46, %c512_i32_25 : i32
      %c0_i32_26 = arith.constant 0 : i32
      %c512_i32_27 = arith.constant 512 : i32
      %49 = arith.addi %c0_i32_26, %c512_i32_27 : i32
      %c1_i32_28 = arith.constant 1 : i32
      scf.for %arg9 = %c0_i32_26 to %49 step %c1_i32_28  : i32 {
        %c1_i32_30 = arith.constant 1 : i32
        %50 = arith.muli %arg9, %c1_i32_30 : i32
        %c0_i32_31 = arith.constant 0 : i32
        %51 = arith.addi %c0_i32_31, %50 : i32
        %52 = arith.addi %47, %51 : i32
        %53 = arith.index_cast %52 : i32 to index
        %54 = memref.load %arg1[%53] : memref<1024xi32, #tpu.memory_space<smem>>
        %55 = arith.addi %48, %51 : i32
        %c0_i32_32 = arith.constant 0 : i32
        %56 = tpu.memref_slice %arg2[%54, %c0_i32_32] : memref<256x128xf32, #tpu.memory_space<any>> -> memref<1x128xf32, #tpu.memory_space<any>>
        %c0_i32_33 = arith.constant 0 : i32
        %57 = tpu.memref_slice %arg7[%55, %c0_i32_33] : memref<1024x128xf32, #tpu.memory_space<vmem>> -> memref<1x128xf32, #tpu.memory_space<vmem>>
        %58 = tpu.memref_slice %arg8[%46] : memref<2x!tpu.dma_semaphore, #tpu.memory_space<semaphore_mem>> -> memref<1x!tpu.dma_semaphore, #tpu.memory_space<semaphore_mem>>
        %59 = tpu.memref_squeeze %58 : memref<1x!tpu.dma_semaphore, #tpu.memory_space<semaphore_mem>> -> memref<!tpu.dma_semaphore, #tpu.memory_space<semaphore_mem>>
        tpu.enqueue_dma source(%56 : memref<1x128xf32, #tpu.memory_space<any>>) target(%57 : memref<1x128xf32, #tpu.memory_space<vmem>>) target_semaphore(%59 : memref<!tpu.dma_semaphore, #tpu.memory_space<semaphore_mem>>)
      }
      %c512_i32_29 = arith.constant 512 : i32
    } else {
    }
    %c1_i32_2 = arith.constant 1 : i32
    %7 = arith.andi %arg0, %c1_i32_2 : i32
    %c512_i32 = arith.constant 512 : i32
    %8 = arith.muli %7, %c512_i32 : i32
    %c0_i32_3 = arith.constant 0 : i32
    %c512_i32_4 = arith.constant 512 : i32
    %9 = arith.addi %c0_i32_3, %c512_i32_4 : i32
    %c1_i32_5 = arith.constant 1 : i32
    scf.for %arg9 = %c0_i32_3 to %9 step %c1_i32_5  : i32 {
      %c1_i32_21 = arith.constant 1 : i32
      %44 = arith.muli %arg9, %c1_i32_21 : i32
      %c0_i32_22 = arith.constant 0 : i32
      %45 = arith.addi %c0_i32_22, %44 : i32
      %46 = arith.addi %8, %45 : i32
      %c0_i32_23 = arith.constant 0 : i32
      %c0_i32_24 = arith.constant 0 : i32
      %47 = tpu.memref_slice %arg2[%c0_i32_23, %c0_i32_24] : memref<256x128xf32, #tpu.memory_space<any>> -> memref<1x128xf32, #tpu.memory_space<any>>
      %c0_i32_25 = arith.constant 0 : i32
      %48 = tpu.memref_slice %arg7[%46, %c0_i32_25] : memref<1024x128xf32, #tpu.memory_space<vmem>> -> memref<1x128xf32, #tpu.memory_space<vmem>>
      %49 = tpu.memref_slice %arg8[%7] : memref<2x!tpu.dma_semaphore, #tpu.memory_space<semaphore_mem>> -> memref<1x!tpu.dma_semaphore, #tpu.memory_space<semaphore_mem>>
      %50 = tpu.memref_squeeze %49 : memref<1x!tpu.dma_semaphore, #tpu.memory_space<semaphore_mem>> -> memref<!tpu.dma_semaphore, #tpu.memory_space<semaphore_mem>>
      tpu.wait_dma2 semaphore(%50 : memref<!tpu.dma_semaphore, #tpu.memory_space<semaphore_mem>>) src(%47 : memref<1x128xf32, #tpu.memory_space<any>>) dst(%48 : memref<1x128xf32, #tpu.memory_space<vmem>>)
    }
    %c512_i32_6 = arith.constant 512 : i32
    %c512_i32_7 = arith.constant 512 : i32
    %10 = arith.muli %7, %c512_i32_7 : i32
    %11 = tpu.assume_multiple %10, 8 : i32
    %12 = arith.index_cast %11 : i32 to index
    %c0 = arith.constant 0 : index
    %13 = vector.load %arg7[%12, %c0] : memref<1024x128xf32, #tpu.memory_space<vmem>>, vector<512x128xf32>
    %14 = arith.truncf %13 : vector<512x128xf32> to vector<512x128xbf16>
    %c0_8 = arith.constant 0 : index
    %c0_9 = arith.constant 0 : index
    %15 = vector.load %arg4[%c0_8, %c0_9] : memref<128x128xbf16, #tpu.memory_space<vmem>>, vector<128x128xbf16>
    %cst = arith.constant dense<0.000000e+00> : vector<512x128xf32>
    %16 = tpu.matmul %14, %15, %cst {dimension_numbers = #tpu.dot_dimension_numbers<[1], [0], [0], [1], [0, 0, 1, 1], [], []>} : vector<512x128xbf16>, vector<128x128xbf16>, vector<512x128xf32> -> vector<512x128xf32>
    %c0_10 = arith.constant 0 : index
    %c0_11 = arith.constant 0 : index
    %17 = vector.load %arg5[%c0_10, %c0_11] : memref<1x128xf32, #tpu.memory_space<vmem>>, vector<1x128xf32>
    %18 = vector.broadcast %17 : vector<1x128xf32> to vector<512x128xf32>
    %19 = arith.addf %16, %18 : vector<512x128xf32>
    %20 = math.tanh %19 : vector<512x128xf32>
    %21 = vector.shape_cast %20 : vector<512x128xf32> to vector<32x16x128xf32>
    %c0_12 = arith.constant 0 : index
    %c0_13 = arith.constant 0 : index
    %22 = vector.load %arg3[%c0_12, %c0_13] : memref<32x16xi32, #tpu.memory_space<vmem>>, vector<32x16xi32>
    %23 = arith.sitofp %22 : vector<32x16xi32> to vector<32x16xf32>
    %24 = vector.shape_cast %23 : vector<32x16xf32> to vector<32x16x1xf32>
    %25 = vector.broadcast %24 : vector<32x16x1xf32> to vector<32x16x128xf32>
    %26 = arith.mulf %21, %25 : vector<32x16x128xf32>
    %cst_14 = arith.constant dense<0.000000e+00> : vector<32x128xf32>
    %27 = vector.multi_reduction <add>, %26, %cst_14 [1] : vector<32x16x128xf32> to vector<32x128xf32>
    %cst_15 = arith.constant dense<0.000000e+00> : vector<32xf32>
    %28 = vector.multi_reduction <add>, %23, %cst_15 [1] : vector<32x16xf32> to vector<32xf32>
    %29 = vector.shape_cast %28 : vector<32xf32> to vector<32x1xf32>
    %cst_16 = arith.constant 1.000000e+00 : f32
    %30 = vector.broadcast %cst_16 : f32 to vector<32x1xf32>
    %31 = arith.maximumf %29, %30 : vector<32x1xf32>
    %32 = tpu.reciprocal %31 {approx = true} : vector<32x1xf32> -> vector<32x1xf32>
    %33 = vector.broadcast %32 : vector<32x1xf32> to vector<32x128xf32>
    %34 = arith.mulf %27, %33 : vector<32x128xf32>
    %35 = arith.mulf %34, %34 : vector<32x128xf32>
    %cst_17 = arith.constant dense<0.000000e+00> : vector<32xf32>
    %36 = vector.multi_reduction <add>, %35, %cst_17 [1] : vector<32x128xf32> to vector<32xf32>
    %37 = vector.shape_cast %36 : vector<32xf32> to vector<32x1xf32>
    %cst_18 = arith.constant 1.000000e-24 : f32
    %38 = vector.broadcast %cst_18 : f32 to vector<32x1xf32>
    %39 = arith.maximumf %37, %38 : vector<32x1xf32>
    %40 = math.rsqrt %39 : vector<32x1xf32>
    %41 = vector.broadcast %40 : vector<32x1xf32> to vector<32x128xf32>
    %42 = arith.mulf %34, %41 : vector<32x128xf32>
    %c0_19 = arith.constant 0 : index
    %c0_20 = arith.constant 0 : index
    %43 = vector.load %arg6[%c0_19, %c0_20] : memref<32x128xf32, #tpu.memory_space<vmem>>, vector<32x128xf32>
    tpu.vector_store %arg6[%c0_19, %c0_20], %42 {strides = array<i32>} : memref<32x128xf32, #tpu.memory_space<vmem>>, vector<32x128xf32>,
    return
  }
  func.func @transform_1(%arg0: i32, %arg1: memref<1024xi32, #tpu.memory_space<smem>>) -> (i32, i32) {
    %c0_i32 = arith.constant 0 : i32
    %c0_i32_0 = arith.constant 0 : i32
    return %arg0, %c0_i32 : i32, i32
  }
  func.func @transform_2(%arg0: i32, %arg1: memref<1024xi32, #tpu.memory_space<smem>>) -> (i32, i32) {
    %c0_i32 = arith.constant 0 : i32
    %c0_i32_0 = arith.constant 0 : i32
    %c0_i32_1 = arith.constant 0 : i32
    return %c0_i32, %c0_i32_0 : i32, i32
  }
  func.func @transform_3(%arg0: i32, %arg1: memref<1024xi32, #tpu.memory_space<smem>>) -> (i32, i32) {
    %c0_i32 = arith.constant 0 : i32
    %c0_i32_0 = arith.constant 0 : i32
    %c0_i32_1 = arith.constant 0 : i32
    return %c0_i32, %c0_i32_0 : i32, i32
  }
  func.func @transform_4(%arg0: i32, %arg1: memref<1024xi32, #tpu.memory_space<smem>>) -> (i32, i32) {
    %c0_i32 = arith.constant 0 : i32
    %c0_i32_0 = arith.constant 0 : i32
    return %arg0, %c0_i32 : i32, i32
  }
}

</mosaic_0001>

<llo_original>
// kernel: tpu_custom_call.1
$region0: #{tpu_custom_call.1}
  #allocation0 [shape = 'u32[]', space=smem, size = 0x4, offset = 0x4, fixed_abs, tag = 'smem constant byte address 0x4 - core index']
  #allocation1 [shape = 'u32[144,128]{1,0:T(1,128)}', space=vmem, size = 0x12000, scoped, tag = 'internal scratch']
  #allocation2 [shape = 'f32[1024,128]{1,0:T(8,128)}', space=vmem, size = 0x80000, scoped, tag = 'scratch operand']
  #allocation3 [shape = 's32[2]{0}', space=sflag, size = 0x8, scoped, tag = 'scratch operand']
  #allocation4 [shape = 's32[1]{0}', space=sflag, size = 0x4, scoped, tag = 'scoped memory for tpu_custom_call.1']
  #allocation5 [shape = 'u8[4096]{0}', space=smem, size = 0x1000, scoped, tag = 'prefetched SMEM operand 0']
  #allocation8 [shape = 's32[]', space=sflag, size = 0x4, offset = 0, fixed_abs, tag = 'sflag constant byte address 0x0 - dummy sync flag']
  #allocation9 [shape = 's32[]', space=sflag, size = 0x4, offset = 0, fixed_abs, tag = 'sflag constant byte address 0x0 - dummy sync flag']
  #allocation10 [shape = 'u32[]', space=smem, size = 0x4, offset = 0x44, fixed_abs, tag = 'smem constant byte address 0x44 - assertion arg 0']
  #allocation11 [shape = 'u32[]', space=smem, size = 0x4, offset = 0x48, fixed_abs, tag = 'smem constant byte address 0x48 - assertion arg 1']
  #allocation12 [shape = 's32[]', space=sflag, size = 0x4, offset = 0, fixed_abs, tag = 'sflag constant byte address 0x0 - dummy sync flag']
  #allocation13 [shape = 's32[]', space=sflag, size = 0x4, offset = 0, fixed_abs, tag = 'sflag constant byte address 0x0 - dummy sync flag']
  %s0 = inlined_call_operand.vmem [shape: s32[1024], index: 0, kind: input, shape index: {}]
  %s1 = inlined_call_operand.hbm [shape: f32[256,128], index: 1, kind: input, shape index: {}]
  %s2 = inlined_call_operand.vmem [shape: s32[64,16], index: 2, kind: input, shape index: {}]
  %s3 = inlined_call_operand.vmem [shape: bf16[128,128], index: 3, kind: input, shape index: {}]
  %s4 = inlined_call_operand.vmem [shape: f32[1,128], index: 4, kind: input, shape index: {}]
  %s5 = inlined_call_operand.hbm [shape: f32[64,128], index: 5, kind: output, shape index: {}]
  %s6 = sld [smem:[#allocation0]]
  $region82: #{tpu_custom_call.1} parent=0
    _
  %s8 = ssub.s32 1, %s6
  %s9 = scalar_select 0, %s8, %s6
  %s10 = sshll.u32 %s0, 4
  %s11 = int_to_ptr.vmem [resolvable:$true] %s10
  %13 = dma.vmem_to_smem %s11, 128, [#allocation5], [#allocation4]
  %14 = dma.done [#allocation4], 128
  %15 = sfence
  $region1: #{tpu_custom_call.1} parent=0
    #allocation6 [shape = 'u8[32768]{0}', space=vmem, size = 0x8000, scoped, tag = 'output window, operand 0']
    #allocation7 [shape = 's32[2]{0}', space=sflag, size = 0x8, scoped, tag = 'scoped memory for tpu_custom_call.1']
    %16 = vsyncpa [#allocation7], 0
    %s17 = scalar_lea.sflag [#allocation7], 1
    %18 = vsyncpa %s17, 0
    loop: start=0, step=1, limit=4
    $region2: #{tpu_custom_call.1} parent=1 // loop_pre_header
      _
    $region3: #{tpu_custom_call.1} parent=1 // loop_header
      %s20 = sphi 0, %s24
      %p21 = scmp.ge.s32.totalorder %s20, 4
      %s30 = sphi 0, %s32
      %s33 = sphi 0, %s30
      %s34 = sphi 0, %s33
      %s50 = sphi 0, %s34
      %s54 = sphi 0, %s54
      %s56 = sphi 0, %s54
      %s57 = sphi 0, %s56
      %s71 = sphi 0, %s57
      %s75 = sphi 0, %s75
      %s77 = sphi 0, %s75
      %s78 = sphi 0, %s77
      %s92 = sphi 0, %s78
      %s98 = sphi 0, %s100
      %s101 = sphi 0, %s98
      %s102 = sphi 0, %s101
      %s118 = sphi 0, %s102
    $region4: #{tpu_custom_call.1} parent=1 // loop_header_branch
      %23 = sbr.rel (%p21) target = $region8
    $region5: #{tpu_custom_call.1} parent=1 // loop_body
      %s25 = ssub.s32 %s20, 1
      %s26 = ssub.s32 %s20, 2
      %s27 = sadd.s32 %s20, 1
      %s28 = ssub.s32 %s20, %s27
      %p29 = scmp.eq.s32.totalorder %s28, 0
      %s31 = sadd.s32 %s30, 1
      %s32 = scalar_select %p29, %s30, %s31
      %p35 = pneg %p29
      %p36 = scmp.eq.s32.totalorder %s20, 1
      %p37 = por %p35, %p36
      %p38 = scmp.ne.s32.totalorder %s30, %s33
      %p39 = scmp.eq.s32.totalorder %s20, 0
      %p40 = por %p38, %p39
      %p41 = scmp.ne.s32.totalorder %s30, %s33
      %p42 = scmp.eq.s32.totalorder %s25, 1
      %p43 = por %p41, %p42
      %p44 = scmp.ne.s32.totalorder %s33, %s34
      %p45 = scmp.eq.s32.totalorder %s25, 0
      %p46 = por %p44, %p45
      %p47 = scmp.ne.s32.totalorder %s33, %s34
      %p48 = scmp.eq.s32.totalorder %s26, 1
      %p49 = por %p47, %p48
      %p51 = scmp.ne.s32.totalorder %s34, %s50
      %p52 = scmp.eq.s32.totalorder %s26, 0
      %p53 = por %p51, %p52
      %s55 = sadd.s32 %s54, 1
      %p58 = scmp.eq.s32.totalorder %s20, 1
      %p59 = scmp.ne.s32.totalorder %s54, %s56
      %p60 = scmp.eq.s32.totalorder %s20, 0
      %p61 = por %p59, %p60
      %p62 = scmp.ne.s32.totalorder %s54, %s56
      %p63 = scmp.eq.s32.totalorder %s25, 1
      %p64 = por %p62, %p63
      %p65 = scmp.ne.s32.totalorder %s56, %s57
      %p66 = scmp.eq.s32.totalorder %s25, 0
      %p67 = por %p65, %p66
      %p68 = scmp.ne.s32.totalorder %s56, %s57
      %p69 = scmp.eq.s32.totalorder %s26, 1
      %p70 = por %p68, %p69
      %p72 = scmp.ne.s32.totalorder %s57, %s71
      %p73 = scmp.eq.s32.totalorder %s26, 0
      %p74 = por %p72, %p73
      %s76 = sadd.s32 %s75, 1
      %p79 = scmp.eq.s32.totalorder %s20, 1
      %p80 = scmp.ne.s32.totalorder %s75, %s77
      %p81 = scmp.eq.s32.totalorder %s20, 0
      %p82 = por %p80, %p81
      %p83 = scmp.ne.s32.totalorder %s75, %s77
      %p84 = scmp.eq.s32.totalorder %s25, 1
      %p85 = por %p83, %p84
      %p86 = scmp.ne.s32.totalorder %s77, %s78
      %p87 = scmp.eq.s32.totalorder %s25, 0
      %p88 = por %p86, %p87
      %p89 = scmp.ne.s32.totalorder %s77, %s78
      %p90 = scmp.eq.s32.totalorder %s26, 1
      %p91 = por %p89, %p90
      %p93 = scmp.ne.s32.totalorder %s78, %s92
      %p94 = scmp.eq.s32.totalorder %s26, 0
      %p95 = por %p93, %p94
      %s96 = ssub.s32 %s20, %s27
      %p97 = scmp.eq.s32.totalorder %s96, 0
      %s99 = sadd.s32 %s98, 1
      %s100 = scalar_select %p97, %s98, %s99
      %p103 = pneg %p97
      %p104 = scmp.eq.s32.totalorder %s20, 1
      %p105 = por %p103, %p104
      %p106 = scmp.ne.s32.totalorder %s98, %s101
      %p107 = scmp.eq.s32.totalorder %s20, 0
      %p108 = por %p106, %p107
      %p109 = scmp.ne.s32.totalorder %s98, %s101
      %p110 = scmp.eq.s32.totalorder %s25, 1
      %p111 = por %p109, %p110
      %p112 = scmp.ne.s32.totalorder %s101, %s102
      %p113 = scmp.eq.s32.totalorder %s25, 0
      %p114 = por %p112, %p113
      %p115 = scmp.ne.s32.totalorder %s101, %s102
      %p116 = scmp.eq.s32.totalorder %s26, 1
      %p117 = por %p115, %p116
      %p119 = scmp.ne.s32.totalorder %s102, %s118
      %p120 = scmp.eq.s32.totalorder %s26, 0
      %p121 = por %p119, %p120
      %p122 = scmp.le.s32.totalorder 1, %s20
      %p123 = scmp.lt.s32.totalorder %s20, 3
      %p124 = pnand %p122, %p123
      %p125 = pneg %p124
      // Predicated region
      $region9: #{tpu_custom_call.1} parent=5 // pred_check
        _
      $region10: #{tpu_custom_call.1} parent=5 // pred_check_branch
        %127 = sbr.rel (%p124) target = $region12
      $region11: #{tpu_custom_call.1} parent=5 // pred_region
        %s128 = ssub.s32 %s20, 1
        // Predicated region
        $region13: #{tpu_custom_call.1} parent=11 // pred_check
          %p129 = pneg %p67
        $region14: #{tpu_custom_call.1} parent=11 // pred_check_branch
          %131 = sbr.rel (%p129) target = $region16
        $region15: #{tpu_custom_call.1} parent=11 // pred_region
          _
        $region16: #{tpu_custom_call.1} parent=11 // pred_fallthru
          _
        // Predicated region
        $region17: #{tpu_custom_call.1} parent=11 // pred_check
          %p132 = pneg %p88
        $region18: #{tpu_custom_call.1} parent=11 // pred_check_branch
          %134 = sbr.rel (%p132) target = $region20
        $region19: #{tpu_custom_call.1} parent=11 // pred_region
          _
        $region20: #{tpu_custom_call.1} parent=11 // pred_fallthru
          _
      $region12: #{tpu_custom_call.1} parent=5 // pred_fallthru
        _
      %p135 = scmp.lt.s32.totalorder %s20, 2
      // Predicated region
      $region21: #{tpu_custom_call.1} parent=5 // pred_check
        %p136 = pneg %p135
      $region22: #{tpu_custom_call.1} parent=5 // pred_check_branch
        %138 = sbr.rel (%p136) target = $region24
      $region23: #{tpu_custom_call.1} parent=5 // pred_region
        // Predicated region
        $region25: #{tpu_custom_call.1} parent=23 // pred_check
          %p139 = pneg %p40
        $region26: #{tpu_custom_call.1} parent=23 // pred_check_branch
          %141 = sbr.rel (%p139) target = $region28
        $region27: #{tpu_custom_call.1} parent=23 // pred_region
          %s142 = smul.u32 4, %s20
          %p143 = scmp.lt.s32.totalorder %s142, 7
          %s144 = scalar_select %p143, %s142, 7
          %s145 = smul.addr %s144, 8
          %s146 = scalar_lea.vmem %s2, %s145
          %s147 = smul.u32 4, %s20
        $region28: #{tpu_custom_call.1} parent=23 // pred_fallthru
          _
      $region24: #{tpu_custom_call.1} parent=5 // pred_fallthru
        _
      %p148 = scmp.le.s32.totalorder 1, %s20
      %p149 = scmp.lt.s32.totalorder %s20, 3
      %p150 = pnand %p148, %p149
      %p151 = pneg %p150
      // Predicated region
      $region29: #{tpu_custom_call.1} parent=5 // pred_check
        _
      $region30: #{tpu_custom_call.1} parent=5 // pred_check_branch
        %153 = sbr.rel (%p150) target = $region32
      $region31: #{tpu_custom_call.1} parent=5 // pred_region
        %s154 = ssub.s32 %s20, 1
        %s155 = smul.u32 4, %s25
        %p156 = scmp.lt.s32.totalorder %s155, 7
        %s157 = scalar_select %p156, %s155, 7
        %s158 = smul.addr %s157, 8
        %s159 = scalar_lea.vmem %s2, %s158
        %p160 = pneg %p46
        %p161 = pneg %p43
        %p162 = pneg %p67
        %p163 = pneg %p64
        %p164 = pneg %p88
        %p165 = pneg %p85
        %p166 = pneg %p114
        %p167 = pneg %p111
        %s168 = sand.u32 %s101, 1
        %s169 = scalar_lea.sflag [#allocation7], %s168
        %s170 = sand.u32 %s101, 1
        %s171 = smul.addr %s170, 32
        %s172 = scalar_lea.vmem [#allocation6], %s171
        %s173 = smul.u32 4, %s25
        %p174 = scmp.lt.s32.totalorder %s173, 7
        %s175 = scalar_select %p174, %s173, 7
        %s176 = smul.addr %s175, 8
        %s177 = scalar_lea.vmem %s2, %s176
        %s178 = smul.u32 4, %s25
        %s179 = smul.u32 4, %s25
        %p181 = scmp.eq.s32.totalorder %s25, 0
        // Predicated region
        $region33: #{tpu_custom_call.1} parent=31 // pred_check
          %p182 = pneg %p181
        $region34: #{tpu_custom_call.1} parent=31 // pred_check_branch
          %184 = sbr.rel (%p182) target = $region36
        $region35: #{tpu_custom_call.1} parent=31 // pred_region
          loop: start=0, step=1, limit=512
          $region37: #{tpu_custom_call.1} parent=35 // loop_pre_header
            _
          $region38: #{tpu_custom_call.1} parent=35 // loop_header
            %s186 = sphi 0, %s190
            %p187 = scmp.ge.s32.totalorder %s186, 512
          $region39: #{tpu_custom_call.1} parent=35 // loop_header_branch
            %189 = sbr.rel (%p187) target = $region43
          $region40: #{tpu_custom_call.1} parent=35 // loop_body
            %s191 = sld [smem:[#allocation5 + %s186]]
            %s192 = smul.addr %s191, 16
            %s193 = scalar_lea.hbm %s1, %s192
            %s194 = scalar_lea.vmem [#allocation2], %s186
            // Predicated region
            $region44: #{tpu_custom_call.1} parent=40 // pred_check
              _
            $region45: #{tpu_custom_call.1} parent=40 // pred_check_branch
              %196 = sbr.rel target = $region47
            $region46: #{tpu_custom_call.1} parent=40 // pred_region
              %197 = sst [smem:[#allocation10]] [#allocation9]
              %198 = sst [smem:[#allocation11]] [#allocation8]
            $region47: #{tpu_custom_call.1} parent=40 // pred_fallthru
              _
            %200 = shalt.err (0)
            %s202 = sshll.u32 %s194, 4
            %s203 = int_to_ptr.vmem [resolvable:$true] %s202
            %205 = dma.hbm_to_vmem [thread:$0]  %s193, 16, %s203, [#allocation3]
          $region41: #{tpu_custom_call.1} parent=35 // loop_footer
            %s190 = sadd.s32 1, %s186
          $region42: #{tpu_custom_call.1} parent=35 // loop_footer_branch
            %185 = sbr.rel target = $region38
          $region43: #{tpu_custom_call.1} parent=35 // loop_exit
            _
        $region36: #{tpu_custom_call.1} parent=31 // pred_fallthru
          _
        %s206 = sadd.s32 %s25, 1
        %p207 = scmp.lt.s32.totalorder %s206, 2
        // Predicated region
        $region48: #{tpu_custom_call.1} parent=31 // pred_check
          %p208 = pneg %p207
        $region49: #{tpu_custom_call.1} parent=31 // pred_check_branch
          %210 = sbr.rel (%p208) target = $region51
        $region50: #{tpu_custom_call.1} parent=31 // pred_region
          %s211 = sand.u32 %s206, 1
          %s212 = smul.u32 %s206, 512
          %s213 = smul.u32 %s211, 512
          loop: start=0, step=1, limit=512
          $region52: #{tpu_custom_call.1} parent=50 // loop_pre_header
            _
          $region53: #{tpu_custom_call.1} parent=50 // loop_header
            %s215 = sphi 0, %s219
            %p216 = scmp.ge.s32.totalorder %s215, 512
          $region54: #{tpu_custom_call.1} parent=50 // loop_header_branch
            %218 = sbr.rel (%p216) target = $region58
          $region55: #{tpu_custom_call.1} parent=50 // loop_body
            %s220 = sadd.s32 %s212, %s215
            %s221 = sld [smem:[#allocation5 + %s220]]
            %s222 = sadd.s32 %s213, %s215
            %s223 = smul.addr %s221, 16
            %s224 = scalar_lea.hbm %s1, %s223
            %s225 = scalar_lea.vmem [#allocation2], %s222
            %s226 = scalar_lea.sflag [#allocation3], %s211
            // Predicated region
            $region59: #{tpu_custom_call.1} parent=55 // pred_check
              _
            $region60: #{tpu_custom_call.1} parent=55 // pred_check_branch
              %228 = sbr.rel target = $region62
            $region61: #{tpu_custom_call.1} parent=55 // pred_region
              %229 = sst [smem:[#allocation10]] [#allocation13]
              %230 = sst [smem:[#allocation11]] [#allocation12]
            $region62: #{tpu_custom_call.1} parent=55 // pred_fallthru
              _
            %232 = shalt.err (0)
            %s234 = sshll.u32 %s225, 4
            %s235 = int_to_ptr.vmem [resolvable:$true] %s234
            %237 = dma.hbm_to_vmem [thread:$0]  %s224, 16, %s235, %s226
          $region56: #{tpu_custom_call.1} parent=50 // loop_footer
            %s219 = sadd.s32 1, %s215
          $region57: #{tpu_custom_call.1} parent=50 // loop_footer_branch
            %214 = sbr.rel target = $region53
          $region58: #{tpu_custom_call.1} parent=50 // loop_exit
            _
        $region51: #{tpu_custom_call.1} parent=31 // pred_fallthru
          _
        %s238 = sand.u32 %s25, 1
        %s239 = smul.u32 %s238, 512
        loop: start=0, step=1, limit=512
        $region63: #{tpu_custom_call.1} parent=31 // loop_pre_header
          _
        $region64: #{tpu_custom_call.1} parent=31 // loop_header
          %s241 = sphi 0, %s245
          %p242 = scmp.ge.s32.totalorder %s241, 512
        $region65: #{tpu_custom_call.1} parent=31 // loop_header_branch
          %244 = sbr.rel (%p242) target = $region69
        $region66: #{tpu_custom_call.1} parent=31 // loop_body
          %s246 = scalar_lea.sflag [#allocation3], %s238
          %s247 = smul.u32 1, 1
          %s248 = sshll.u32 %s247, 4
          %249 = dma.done %s246, %s248
        $region67: #{tpu_custom_call.1} parent=31 // loop_footer
          %s245 = sadd.s32 1, %s241
        $region68: #{tpu_custom_call.1} parent=31 // loop_footer_branch
          %240 = sbr.rel target = $region64
        $region69: #{tpu_custom_call.1} parent=31 // loop_exit
          _
        %s250 = scalar_lea.vmem [#allocation2], %s239
        %v251 = vld [vmem:[%s250] sm:$0xff]
        %v252 = vld [vmem:[%s250 + $0x8] sm:$0xff]
        %v253 = vld [vmem:[%s250 + $0x10] sm:$0xff]
        %v254 = vld [vmem:[%s250 + $0x18] sm:$0xff]
        %v255 = vld [vmem:[%s250 + $0x20] sm:$0xff]
        %v256 = vld [vmem:[%s250 + $0x28] sm:$0xff]
        %v257 = vld [vmem:[%s250 + $0x30] sm:$0xff]
        %v258 = vld [vmem:[%s250 + $0x38] sm:$0xff]
        %v259 = vld [vmem:[%s250 + $0x40] sm:$0xff]
        %v260 = vld [vmem:[%s250 + $0x48] sm:$0xff]
        %v261 = vld [vmem:[%s250 + $0x50] sm:$0xff]
        %v262 = vld [vmem:[%s250 + $0x58] sm:$0xff]
        %v263 = vld [vmem:[%s250 + $0x60] sm:$0xff]
        %v264 = vld [vmem:[%s250 + $0x68] sm:$0xff]
        %v265 = vld [vmem:[%s250 + $0x70] sm:$0xff]
        %v266 = vld [vmem:[%s250 + $0x78] sm:$0xff]
        %v267 = vld [vmem:[%s250 + $0x80] sm:$0xff]
        %v268 = vld [vmem:[%s250 + $0x88] sm:$0xff]
        %v269 = vld [vmem:[%s250 + $0x90] sm:$0xff]
        %v270 = vld [vmem:[%s250 + $0x98] sm:$0xff]
        %v271 = vld [vmem:[%s250 + $0xa0] sm:$0xff]
        %v272 = vld [vmem:[%s250 + $0xa8] sm:$0xff]
        %v273 = vld [vmem:[%s250 + $0xb0] sm:$0xff]
        %v274 = vld [vmem:[%s250 + $0xb8] sm:$0xff]
        %v275 = vld [vmem:[%s250 + $0xc0] sm:$0xff]
        %v276 = vld [vmem:[%s250 + $0xc8] sm:$0xff]
        %v277 = vld [vmem:[%s250 + $0xd0] sm:$0xff]
        %v278 = vld [vmem:[%s250 + $0xd8] sm:$0xff]
        %v279 = vld [vmem:[%s250 + $0xe0] sm:$0xff]
        %v280 = vld [vmem:[%s250 + $0xe8] sm:$0xff]
        %v281 = vld [vmem:[%s250 + $0xf0] sm:$0xff]
        %v282 = vld [vmem:[%s250 + $0xf8] sm:$0xff]
        %v283 = vld [vmem:[%s250 + $0x100] sm:$0xff]
        %v284 = vld [vmem:[%s250 + $0x108] sm:$0xff]
        %v285 = vld [vmem:[%s250 + $0x110] sm:$0xff]
        %v286 = vld [vmem:[%s250 + $0x118] sm:$0xff]
        %v287 = vld [vmem:[%s250 + $0x120] sm:$0xff]
        %v288 = vld [vmem:[%s250 + $0x128] sm:$0xff]
        %v289 = vld [vmem:[%s250 + $0x130] sm:$0xff]
        %v290 = vld [vmem:[%s250 + $0x138] sm:$0xff]
        %v291 = vld [vmem:[%s250 + $0x140] sm:$0xff]
        %v292 = vld [vmem:[%s250 + $0x148] sm:$0xff]
        %v293 = vld [vmem:[%s250 + $0x150] sm:$0xff]
        %v294 = vld [vmem:[%s250 + $0x158] sm:$0xff]
        %v295 = vld [vmem:[%s250 + $0x160] sm:$0xff]
        %v296 = vld [vmem:[%s250 + $0x168] sm:$0xff]
        %v297 = vld [vmem:[%s250 + $0x170] sm:$0xff]
        %v298 = vld [vmem:[%s250 + $0x178] sm:$0xff]
        %v299 = vld [vmem:[%s250 + $0x180] sm:$0xff]
        %v300 = vld [vmem:[%s250 + $0x188] sm:$0xff]
        %v301 = vld [vmem:[%s250 + $0x190] sm:$0xff]
        %v302 = vld [vmem:[%s250 + $0x198] sm:$0xff]
        %v303 = vld [vmem:[%s250 + $0x1a0] sm:$0xff]
        %v304 = vld [vmem:[%s250 + $0x1a8] sm:$0xff]
        %v305 = vld [vmem:[%s250 + $0x1b0] sm:$0xff]
        %v306 = vld [vmem:[%s250 + $0x1b8] sm:$0xff]
        %v307 = vld [vmem:[%s250 + $0x1c0] sm:$0xff]
        %v308 = vld [vmem:[%s250 + $0x1c8] sm:$0xff]
        %v309 = vld [vmem:[%s250 + $0x1d0] sm:$0xff]
        %v310 = vld [vmem:[%s250 + $0x1d8] sm:$0xff]
        %v311 = vld [vmem:[%s250 + $0x1e0] sm:$0xff]
        %v312 = vld [vmem:[%s250 + $0x1e8] sm:$0xff]
        %v313 = vld [vmem:[%s250 + $0x1f0] sm:$0xff]
        %v314 = vld [vmem:[%s250 + $0x1f8] sm:$0xff]
        %v315 = vpack.c.bf16 %v252, %v251
        %v316 = vpack.c.bf16 %v254, %v253
        %v317 = vpack.c.bf16 %v256, %v255
        %v318 = vpack.c.bf16 %v258, %v257
        %v319 = vpack.c.bf16 %v260, %v259
        %v320 = vpack.c.bf16 %v262, %v261
        %v321 = vpack.c.bf16 %v264, %v263
        %v322 = vpack.c.bf16 %v266, %v265
        %v323 = vpack.c.bf16 %v268, %v267
        %v324 = vpack.c.bf16 %v270, %v269
        %v325 = vpack.c.bf16 %v272, %v271
        %v326 = vpack.c.bf16 %v274, %v273
        %v327 = vpack.c.bf16 %v276, %v275
        %v328 = vpack.c.bf16 %v278, %v277
        %v329 = vpack.c.bf16 %v280, %v279
        %v330 = vpack.c.bf16 %v282, %v281
        %v331 = vpack.c.bf16 %v284, %v283
        %v332 = vpack.c.bf16 %v286, %v285
        %v333 = vpack.c.bf16 %v288, %v287
        %v334 = vpack.c.bf16 %v290, %v289
        %v335 = vpack.c.bf16 %v292, %v291
        %v336 = vpack.c.bf16 %v294, %v293
        %v337 = vpack.c.bf16 %v296, %v295
        %v338 = vpack.c.bf16 %v298, %v297
        %v339 = vpack.c.bf16 %v300, %v299
        %v340 = vpack.c.bf16 %v302, %v301
        %v341 = vpack.c.bf16 %v304, %v303
        %v342 = vpack.c.bf16 %v306, %v305
        %v343 = vpack.c.bf16 %v308, %v307
        %v344 = vpack.c.bf16 %v310, %v309
        %v345 = vpack.c.bf16 %v312, %v311
        %v346 = vpack.c.bf16 %v314, %v313
        %v347 = vld [vmem:[%s3] sm:$0xf]
        %v348 = vld [vmem:[%s3 + $0x4] sm:$0xf]
        %v349 = vld [vmem:[%s3 + $0x8] sm:$0xf]
        %v350 = vld [vmem:[%s3 + $0xc] sm:$0xf]
        %v351 = vld [vmem:[%s3 + $0x10] sm:$0xf]
        %v352 = vld [vmem:[%s3 + $0x14] sm:$0xf]
        %v353 = vld [vmem:[%s3 + $0x18] sm:$0xf]
        %v354 = vld [vmem:[%s3 + $0x1c] sm:$0xf]
        %v355 = vld [vmem:[%s3 + $0x20] sm:$0xf]
        %v356 = vld [vmem:[%s3 + $0x24] sm:$0xf]
        %v357 = vld [vmem:[%s3 + $0x28] sm:$0xf]
        %v358 = vld [vmem:[%s3 + $0x2c] sm:$0xf]
        %v359 = vld [vmem:[%s3 + $0x30] sm:$0xf]
        %v360 = vld [vmem:[%s3 + $0x34] sm:$0xf]
        %v361 = vld [vmem:[%s3 + $0x38] sm:$0xf]
        %v362 = vld [vmem:[%s3 + $0x3c] sm:$0xf]
        %v363 = vld [vmem:[%s4] sm:$0x1]
        %v365 = vlaneseq
        %v366 = vshrl.u32 %v365, 7
        %v367 = vsub.s32 0, %v366
        %v368 = vrot.slane %v363, %v367
        %v386 = vunpack.c.l.b16 %v347
        %v387 = vunpack.c.l.b16 %v348
        %v388 = vunpack.c.l.b16 %v349
        %v389 = vunpack.c.l.b16 %v350
        %v390 = vunpack.c.l.b16 %v351
        %v391 = vunpack.c.l.b16 %v352
        %v392 = vunpack.c.l.b16 %v353
        %v393 = vunpack.c.l.b16 %v354
        %v394 = vunpack.c.l.b16 %v355
        %v395 = vunpack.c.l.b16 %v356
        %v396 = vunpack.c.l.b16 %v357
        %v397 = vunpack.c.l.b16 %v358
        %v398 = vunpack.c.l.b16 %v359
        %v399 = vunpack.c.l.b16 %v360
        %v400 = vunpack.c.l.b16 %v361
        %v401 = vunpack.c.l.b16 %v362
        %v402 = vpack.c.b16 %v387, %v386
        %v403 = vpack.c.b16 %v389, %v388
        %v404 = vpack.c.b16 %v391, %v390
        %v405 = vpack.c.b16 %v393, %v392
        %v406 = vpack.c.b16 %v395, %v394
        %v407 = vpack.c.b16 %v397, %v396
        %v408 = vpack.c.b16 %v399, %v398
        %v409 = vpack.c.b16 %v401, %v400
        %418 = vmatprep.subr.bf16.mxu0 0
        %419 = vmatpush1.bf16.msra.mxu0 %v402
        %420 = vmatprep.subr.bf16.mxu0 0
        %421 = vmatpush1.bf16.msra.mxu0 %v403
        %422 = vmatprep.subr.bf16.mxu0 0
        %423 = vmatpush1.bf16.msra.mxu0 %v404
        %424 = vmatprep.subr.bf16.mxu0 0
        %425 = vmatpush1.bf16.msra.mxu0 %v405
        %426 = vmatprep.subr.bf16.mxu0 0
        %427 = vmatpush1.bf16.msra.mxu0 %v406
        %428 = vmatprep.subr.bf16.mxu0 0
        %429 = vmatpush1.bf16.msra.mxu0 %v407
        %430 = vmatprep.subr.bf16.mxu0 0
        %431 = vmatpush1.bf16.msra.mxu0 %v408
        %432 = vmatprep.subr.bf16.mxu0 0
        %433 = vmatpush1.bf16.msra.mxu0 %v409
        %434 = vmatprep.subr.bf16.mxu0 0
        %435 = vmatpush1.bf16.msra.mxu0 0
        %436 = vmatprep.subr.bf16.mxu0 0
        %437 = vmatpush1.bf16.msra.mxu0 0
        %438 = vmatprep.subr.bf16.mxu0 0
        %439 = vmatpush1.bf16.msra.mxu0 0
        %440 = vmatprep.subr.bf16.mxu0 0
        %441 = vmatpush1.bf16.msra.mxu0 0
        %442 = vmatprep.subr.bf16.mxu0 0
        %443 = vmatpush1.bf16.msra.mxu0 0
        %444 = vmatprep.subr.bf16.mxu0 0
        %445 = vmatpush1.bf16.msra.mxu0 0
        %446 = vmatprep.subr.bf16.mxu0 0
        %447 = vmatpush1.bf16.msra.mxu0 0
        %448 = vmatprep.subr.bf16.mxu0 0
        %449 = vmatpush1.bf16.msra.mxu0 0
        %450 = vmatprep.mubr.bf16.mxu0 0
        %451 = vmatmul.mubr.bf16.gmra.mrb[0].mxu0 %v315
        %v452 = vpop.f32.mrb[0].mxu0
        %v453 = vadd.f32 %v368, %v452
        %v454 = vpop.f32.mrb[0].mxu0
        %v455 = vpop.f32.mrb[0].mxu0
        %v456 = vadd.f32 %v368, %v455
        %v457 = vpop.f32.mrb[0].mxu0
        %458 = vmatprep.mubr.bf16.mxu0 0
        %459 = vmatmul.mubr.bf16.gmra.mrb[0].mxu0 %v316
        %v460 = vpop.f32.mrb[0].mxu0
        %v461 = vadd.f32 %v368, %v460
        %v462 = vpop.f32.mrb[0].mxu0
        %v463 = vpop.f32.mrb[0].mxu0
        %v464 = vadd.f32 %v368, %v463
        %v465 = vpop.f32.mrb[0].mxu0
        %466 = vmatprep.mubr.bf16.mxu0 0
        %467 = vmatmul.mubr.bf16.gmra.mrb[0].mxu0 %v317
        %v468 = vpop.f32.mrb[0].mxu0
        %v469 = vadd.f32 %v368, %v468
        %v470 = vpop.f32.mrb[0].mxu0
        %v471 = vpop.f32.mrb[0].mxu0
        %v472 = vadd.f32 %v368, %v471
        %v473 = vpop.f32.mrb[0].mxu0
        %474 = vmatprep.mubr.bf16.mxu0 0
        %475 = vmatmul.mubr.bf16.gmra.mrb[0].mxu0 %v318
        %v476 = vpop.f32.mrb[0].mxu0
        %v477 = vadd.f32 %v368, %v476
        %v478 = vpop.f32.mrb[0].mxu0
        %v479 = vpop.f32.mrb[0].mxu0
        %v480 = vadd.f32 %v368, %v479
        %v481 = vpop.f32.mrb[0].mxu0
        %482 = vmatprep.mubr.bf16.mxu0 0
        %483 = vmatmul.mubr.bf16.gmra.mrb[0].mxu0 %v319
        %v484 = vpop.f32.mrb[0].mxu0
        %v485 = vadd.f32 %v368, %v484
        %v486 = vpop.f32.mrb[0].mxu0
        %v487 = vpop.f32.mrb[0].mxu0
        %v488 = vadd.f32 %v368, %v487
        %v489 = vpop.f32.mrb[0].mxu0
        %490 = vmatprep.mubr.bf16.mxu0 0
        %491 = vmatmul.mubr.bf16.gmra.mrb[0].mxu0 %v320
        %v492 = vpop.f32.mrb[0].mxu0
        %v493 = vadd.f32 %v368, %v492
        %v494 = vpop.f32.mrb[0].mxu0
        %v495 = vpop.f32.mrb[0].mxu0
        %v496 = vadd.f32 %v368, %v495
        %v497 = vpop.f32.mrb[0].mxu0
        %498 = vmatprep.mubr.bf16.mxu0 0
        %499 = vmatmul.mubr.bf16.gmra.mrb[0].mxu0 %v321
        %v500 = vpop.f32.mrb[0].mxu0
        %v501 = vadd.f32 %v368, %v500
        %v502 = vpop.f32.mrb[0].mxu0
        %v503 = vpop.f32.mrb[0].mxu0
        %v504 = vadd.f32 %v368, %v503
        %v505 = vpop.f32.mrb[0].mxu0
        %506 = vmatprep.mubr.bf16.mxu0 0
        %507 = vmatmul.mubr.bf16.gmra.mrb[0].mxu0 %v322
        %v508 = vpop.f32.mrb[0].mxu0
        %v509 = vadd.f32 %v368, %v508
        %v510 = vpop.f32.mrb[0].mxu0
        %v511 = vpop.f32.mrb[0].mxu0
        %v512 = vadd.f32 %v368, %v511
        %v513 = vpop.f32.mrb[0].mxu0
        %514 = vmatprep.mubr.bf16.mxu0 0
        %515 = vmatmul.mubr.bf16.gmra.mrb[0].mxu0 %v323
        %v516 = vpop.f32.mrb[0].mxu0
        %v517 = vadd.f32 %v368, %v516
        %v518 = vpop.f32.mrb[0].mxu0
        %v519 = vpop.f32.mrb[0].mxu0
        %v520 = vadd.f32 %v368, %v519
        %v521 = vpop.f32.mrb[0].mxu0
        %522 = vmatprep.mubr.bf16.mxu0 0
        %523 = vmatmul.mubr.bf16.gmra.mrb[0].mxu0 %v324
        %v524 = vpop.f32.mrb[0].mxu0
        %v525 = vadd.f32 %v368, %v524
        %v526 = vpop.f32.mrb[0].mxu0
        %v527 = vpop.f32.mrb[0].mxu0
        %v528 = vadd.f32 %v368, %v527
        %v529 = vpop.f32.mrb[0].mxu0
        %530 = vmatprep.mubr.bf16.mxu0 0
        %531 = vmatmul.mubr.bf16.gmra.mrb[0].mxu0 %v325
        %v532 = vpop.f32.mrb[0].mxu0
        %v533 = vadd.f32 %v368, %v532
        %v534 = vpop.f32.mrb[0].mxu0
        %v535 = vpop.f32.mrb[0].mxu0
        %v536 = vadd.f32 %v368, %v535
        %v537 = vpop.f32.mrb[0].mxu0
        %538 = vmatprep.mubr.bf16.mxu0 0
        %539 = vmatmul.mubr.bf16.gmra.mrb[0].mxu0 %v326
        %v540 = vpop.f32.mrb[0].mxu0
        %v541 = vadd.f32 %v368, %v540
        %v542 = vpop.f32.mrb[0].mxu0
        %v543 = vpop.f32.mrb[0].mxu0
        %v544 = vadd.f32 %v368, %v543
        %v545 = vpop.f32.mrb[0].mxu0
        %546 = vmatprep.mubr.bf16.mxu0 0
        %547 = vmatmul.mubr.bf16.gmra.mrb[0].mxu0 %v327
        %v548 = vpop.f32.mrb[0].mxu0
        %v549 = vadd.f32 %v368, %v548
        %v550 = vpop.f32.mrb[0].mxu0
        %v551 = vpop.f32.mrb[0].mxu0
        %v552 = vadd.f32 %v368, %v551
        %v553 = vpop.f32.mrb[0].mxu0
        %554 = vmatprep.mubr.bf16.mxu0 0
        %555 = vmatmul.mubr.bf16.gmra.mrb[0].mxu0 %v328
        %v556 = vpop.f32.mrb[0].mxu0
        %v557 = vadd.f32 %v368, %v556
        %v558 = vpop.f32.mrb[0].mxu0
        %v559 = vpop.f32.mrb[0].mxu0
        %v560 = vadd.f32 %v368, %v559
        %v561 = vpop.f32.mrb[0].mxu0
        %562 = vmatprep.mubr.bf16.mxu0 0
        %563 = vmatmul.mubr.bf16.gmra.mrb[0].mxu0 %v329
        %v564 = vpop.f32.mrb[0].mxu0
        %v565 = vadd.f32 %v368, %v564
        %v566 = vpop.f32.mrb[0].mxu0
        %v567 = vpop.f32.mrb[0].mxu0
        %v568 = vadd.f32 %v368, %v567
        %v569 = vpop.f32.mrb[0].mxu0
        %570 = vmatprep.mubr.bf16.mxu0 0
        %571 = vmatmul.mubr.bf16.gmra.mrb[0].mxu0 %v330
        %v572 = vpop.f32.mrb[0].mxu0
        %v573 = vadd.f32 %v368, %v572
        %v574 = vpop.f32.mrb[0].mxu0
        %v575 = vpop.f32.mrb[0].mxu0
        %v576 = vadd.f32 %v368, %v575
        %v577 = vpop.f32.mrb[0].mxu0
        %578 = vmatprep.mubr.bf16.mxu0 0
        %579 = vmatmul.mubr.bf16.gmra.mrb[0].mxu0 %v331
        %v580 = vpop.f32.mrb[0].mxu0
        %v581 = vadd.f32 %v368, %v580
        %v582 = vpop.f32.mrb[0].mxu0
        %v583 = vpop.f32.mrb[0].mxu0
        %v584 = vadd.f32 %v368, %v583
        %v585 = vpop.f32.mrb[0].mxu0
        %586 = vmatprep.mubr.bf16.mxu0 0
        %587 = vmatmul.mubr.bf16.gmra.mrb[0].mxu0 %v332
        %v588 = vpop.f32.mrb[0].mxu0
        %v589 = vadd.f32 %v368, %v588
        %v590 = vpop.f32.mrb[0].mxu0
        %v591 = vpop.f32.mrb[0].mxu0
        %v592 = vadd.f32 %v368, %v591
        %v593 = vpop.f32.mrb[0].mxu0
        %594 = vmatprep.mubr.bf16.mxu0 0
        %595 = vmatmul.mubr.bf16.gmra.mrb[0].mxu0 %v333
        %v596 = vpop.f32.mrb[0].mxu0
        %v597 = vadd.f32 %v368, %v596
        %v598 = vpop.f32.mrb[0].mxu0
        %v599 = vpop.f32.mrb[0].mxu0
        %v600 = vadd.f32 %v368, %v599
        %v601 = vpop.f32.mrb[0].mxu0
        %602 = vmatprep.mubr.bf16.mxu0 0
        %603 = vmatmul.mubr.bf16.gmra.mrb[0].mxu0 %v334
        %v604 = vpop.f32.mrb[0].mxu0
        %v605 = vadd.f32 %v368, %v604
        %v606 = vpop.f32.mrb[0].mxu0
        %v607 = vpop.f32.mrb[0].mxu0
        %v608 = vadd.f32 %v368, %v607
        %v609 = vpop.f32.mrb[0].mxu0
        %610 = vmatprep.mubr.bf16.mxu0 0
        %611 = vmatmul.mubr.bf16.gmra.mrb[0].mxu0 %v335
        %v612 = vpop.f32.mrb[0].mxu0
        %v613 = vadd.f32 %v368, %v612
        %v614 = vpop.f32.mrb[0].mxu0
        %v615 = vpop.f32.mrb[0].mxu0
        %v616 = vadd.f32 %v368, %v615
        %v617 = vpop.f32.mrb[0].mxu0
        %618 = vmatprep.mubr.bf16.mxu0 0
        %619 = vmatmul.mubr.bf16.gmra.mrb[0].mxu0 %v336
        %v620 = vpop.f32.mrb[0].mxu0
        %v621 = vadd.f32 %v368, %v620
        %v622 = vpop.f32.mrb[0].mxu0
        %v623 = vpop.f32.mrb[0].mxu0
        %v624 = vadd.f32 %v368, %v623
        %v625 = vpop.f32.mrb[0].mxu0
        %626 = vmatprep.mubr.bf16.mxu0 0
        %627 = vmatmul.mubr.bf16.gmra.mrb[0].mxu0 %v337
        %v628 = vpop.f32.mrb[0].mxu0
        %v629 = vadd.f32 %v368, %v628
        %v630 = vpop.f32.mrb[0].mxu0
        %v631 = vpop.f32.mrb[0].mxu0
        %v632 = vadd.f32 %v368, %v631
        %v633 = vpop.f32.mrb[0].mxu0
        %634 = vmatprep.mubr.bf16.mxu0 0
        %635 = vmatmul.mubr.bf16.gmra.mrb[0].mxu0 %v338
        %v636 = vpop.f32.mrb[0].mxu0
        %v637 = vadd.f32 %v368, %v636
        %v638 = vpop.f32.mrb[0].mxu0
        %v639 = vpop.f32.mrb[0].mxu0
        %v640 = vadd.f32 %v368, %v639
        %v641 = vpop.f32.mrb[0].mxu0
        %642 = vmatprep.mubr.bf16.mxu0 0
        %643 = vmatmul.mubr.bf16.gmra.mrb[0].mxu0 %v339
        %v644 = vpop.f32.mrb[0].mxu0
        %v645 = vadd.f32 %v368, %v644
        %v646 = vpop.f32.mrb[0].mxu0
        %v647 = vpop.f32.mrb[0].mxu0
        %v648 = vadd.f32 %v368, %v647
        %v649 = vpop.f32.mrb[0].mxu0
        %650 = vmatprep.mubr.bf16.mxu0 0
        %651 = vmatmul.mubr.bf16.gmra.mrb[0].mxu0 %v340
        %v652 = vpop.f32.mrb[0].mxu0
        %v653 = vadd.f32 %v368, %v652
        %v654 = vpop.f32.mrb[0].mxu0
        %v655 = vpop.f32.mrb[0].mxu0
        %v656 = vadd.f32 %v368, %v655
        %v657 = vpop.f32.mrb[0].mxu0
        %658 = vmatprep.mubr.bf16.mxu0 0
        %659 = vmatmul.mubr.bf16.gmra.mrb[0].mxu0 %v341
        %v660 = vpop.f32.mrb[0].mxu0
        %v661 = vadd.f32 %v368, %v660
        %v662 = vpop.f32.mrb[0].mxu0
        %v663 = vpop.f32.mrb[0].mxu0
        %v664 = vadd.f32 %v368, %v663
        %v665 = vpop.f32.mrb[0].mxu0
        %666 = vmatprep.mubr.bf16.mxu0 0
        %667 = vmatmul.mubr.bf16.gmra.mrb[0].mxu0 %v342
        %v668 = vpop.f32.mrb[0].mxu0
        %v669 = vadd.f32 %v368, %v668
        %v670 = vpop.f32.mrb[0].mxu0
        %v671 = vpop.f32.mrb[0].mxu0
        %v672 = vadd.f32 %v368, %v671
        %v673 = vpop.f32.mrb[0].mxu0
        %674 = vmatprep.mubr.bf16.mxu0 0
        %675 = vmatmul.mubr.bf16.gmra.mrb[0].mxu0 %v343
        %v676 = vpop.f32.mrb[0].mxu0
        %v677 = vadd.f32 %v368, %v676
        %v678 = vpop.f32.mrb[0].mxu0
        %v679 = vpop.f32.mrb[0].mxu0
        %v680 = vadd.f32 %v368, %v679
        %v681 = vpop.f32.mrb[0].mxu0
        %682 = vmatprep.mubr.bf16.mxu0 0
        %683 = vmatmul.mubr.bf16.gmra.mrb[0].mxu0 %v344
        %v684 = vpop.f32.mrb[0].mxu0
        %v685 = vadd.f32 %v368, %v684
        %v686 = vpop.f32.mrb[0].mxu0
        %v687 = vpop.f32.mrb[0].mxu0
        %v688 = vadd.f32 %v368, %v687
        %v689 = vpop.f32.mrb[0].mxu0
        %690 = vmatprep.mubr.bf16.mxu0 0
        %691 = vmatmul.mubr.bf16.gmra.mrb[0].mxu0 %v345
        %v692 = vpop.f32.mrb[0].mxu0
        %v693 = vadd.f32 %v368, %v692
        %v694 = vpop.f32.mrb[0].mxu0
        %v695 = vpop.f32.mrb[0].mxu0
        %v696 = vadd.f32 %v368, %v695
        %v697 = vpop.f32.mrb[0].mxu0
        %698 = vmatprep.mubr.bf16.mxu0 0
        %699 = vmatmul.mubr.bf16.gmra.mrb[0].mxu0 %v346
        %v700 = vpop.f32.mrb[0].mxu0
        %v701 = vadd.f32 %v368, %v700
        %v702 = vpop.f32.mrb[0].mxu0
        %v703 = vpop.f32.mrb[0].mxu0
        %v704 = vadd.f32 %v368, %v703
        %v705 = vpop.f32.mrb[0].mxu0
        %706 = vdwg.mxu0
        %v707 = vtanh.pop %v453
        %v708 = vtanh.pop %v456
        %v709 = vtanh.pop %v461
        %v710 = vtanh.pop %v464
        %v711 = vtanh.pop %v469
        %v712 = vtanh.pop %v472
        %v713 = vtanh.pop %v477
        %v714 = vtanh.pop %v480
        %v715 = vtanh.pop %v485
        %v716 = vtanh.pop %v488
        %v717 = vtanh.pop %v493
        %v718 = vtanh.pop %v496
        %v719 = vtanh.pop %v501
        %v720 = vtanh.pop %v504
        %v721 = vtanh.pop %v509
        %v722 = vtanh.pop %v512
        %v723 = vtanh.pop %v517
        %v724 = vtanh.pop %v520
        %v725 = vtanh.pop %v525
        %v726 = vtanh.pop %v528
        %v727 = vtanh.pop %v533
        %v728 = vtanh.pop %v536
        %v729 = vtanh.pop %v541
        %v730 = vtanh.pop %v544
        %v731 = vtanh.pop %v549
        %v732 = vtanh.pop %v552
        %v733 = vtanh.pop %v557
        %v734 = vtanh.pop %v560
        %v735 = vtanh.pop %v565
        %v736 = vtanh.pop %v568
        %v737 = vtanh.pop %v573
        %v738 = vtanh.pop %v576
        %v739 = vtanh.pop %v581
        %v740 = vtanh.pop %v584
        %v741 = vtanh.pop %v589
        %v742 = vtanh.pop %v592
        %v743 = vtanh.pop %v597
        %v744 = vtanh.pop %v600
        %v745 = vtanh.pop %v605
        %v746 = vtanh.pop %v608
        %v747 = vtanh.pop %v613
        %v748 = vtanh.pop %v616
        %v749 = vtanh.pop %v621
        %v750 = vtanh.pop %v624
        %v751 = vtanh.pop %v629
        %v752 = vtanh.pop %v632
        %v753 = vtanh.pop %v637
        %v754 = vtanh.pop %v640
        %v755 = vtanh.pop %v645
        %v756 = vtanh.pop %v648
        %v757 = vtanh.pop %v653
        %v758 = vtanh.pop %v656
        %v759 = vtanh.pop %v661
        %v760 = vtanh.pop %v664
        %v761 = vtanh.pop %v669
        %v762 = vtanh.pop %v672
        %v763 = vtanh.pop %v677
        %v764 = vtanh.pop %v680
        %v765 = vtanh.pop %v685
        %v766 = vtanh.pop %v688
        %v767 = vtanh.pop %v693
        %v768 = vtanh.pop %v696
        %v769 = vtanh.pop %v701
        %v770 = vtanh.pop %v704
        %v771 = vld [vmem:[%s177] sm:$0xff]
        %v772 = vld [vmem:[%s177 + $0x8] sm:$0xff]
        %v773 = vld [vmem:[%s177 + $0x10] sm:$0xff]
        %v774 = vld [vmem:[%s177 + $0x18] sm:$0xff]
        %v775 = vcvt.s32.f32 %v771
        %v776 = vcvt.s32.f32 %v772
        %v777 = vcvt.s32.f32 %v773
        %v778 = vcvt.s32.f32 %v774
        %v779 = vlaneseq
        %v780 = vshrl.u32 %v779, 7
        %v781 = vsub.s32 0, %v780
        %v782 = vrot.slane %v775, %v781
        %784 = vbcast.lane.b32.xlu0 %v782, 256
        %v785 = vpop.permute.xlu0 %784
        %s787 = sor.u32 256, 8
        %788 = vbcast.lane.b32.xlu0 %v782, %s787
        %v789 = vpop.permute.xlu0 %788
        %v790 = vlaneseq
        %v791 = vshrl.u32 %v790, 7
        %v792 = vsub.s32 1, %v791
        %v793 = vrot.slane %v775, %v792
        %795 = vbcast.lane.b32.xlu0 %v793, 256
        %v796 = vpop.permute.xlu0 %795
        %s798 = sor.u32 256, 8
        %799 = vbcast.lane.b32.xlu0 %v793, %s798
        %v800 = vpop.permute.xlu0 %799
        %v801 = vlaneseq
        %v802 = vshrl.u32 %v801, 7
        %v803 = vsub.s32 2, %v802
        %v804 = vrot.slane %v775, %v803
        %806 = vbcast.lane.b32.xlu0 %v804, 256
        %v807 = vpop.permute.xlu0 %806
        %s809 = sor.u32 256, 8
        %810 = vbcast.lane.b32.xlu0 %v804, %s809
        %v811 = vpop.permute.xlu0 %810
        %v812 = vlaneseq
        %v813 = vshrl.u32 %v812, 7
        %v814 = vsub.s32 3, %v813
        %v815 = vrot.slane %v775, %v814
        %817 = vbcast.lane.b32.xlu0 %v815, 256
        %v818 = vpop.permute.xlu0 %817
        %s820 = sor.u32 256, 8
        %821 = vbcast.lane.b32.xlu0 %v815, %s820
        %v822 = vpop.permute.xlu0 %821
        %v823 = vlaneseq
        %v824 = vshrl.u32 %v823, 7
        %v825 = vsub.s32 4, %v824
        %v826 = vrot.slane %v775, %v825
        %828 = vbcast.lane.b32.xlu0 %v826, 256
        %v829 = vpop.permute.xlu0 %828
        %s831 = sor.u32 256, 8
        %832 = vbcast.lane.b32.xlu0 %v826, %s831
        %v833 = vpop.permute.xlu0 %832
        %v834 = vlaneseq
        %v835 = vshrl.u32 %v834, 7
        %v836 = vsub.s32 5, %v835
        %v837 = vrot.slane %v775, %v836
        %839 = vbcast.lane.b32.xlu0 %v837, 256
        %v840 = vpop.permute.xlu0 %839
        %s842 = sor.u32 256, 8
        %843 = vbcast.lane.b32.xlu0 %v837, %s842
        %v844 = vpop.permute.xlu0 %843
        %v845 = vlaneseq
        %v846 = vshrl.u32 %v845, 7
        %v847 = vsub.s32 6, %v846
        %v848 = vrot.slane %v775, %v847
        %850 = vbcast.lane.b32.xlu0 %v848, 256
        %v851 = vpop.permute.xlu0 %850
        %s853 = sor.u32 256, 8
        %854 = vbcast.lane.b32.xlu0 %v848, %s853
        %v855 = vpop.permute.xlu0 %854
        %v856 = vlaneseq
        %v857 = vshrl.u32 %v856, 7
        %v858 = vsub.s32 7, %v857
        %v859 = vrot.slane %v775, %v858
        %861 = vbcast.lane.b32.xlu0 %v859, 256
        %v862 = vpop.permute.xlu0 %861
        %s864 = sor.u32 256, 8
        %865 = vbcast.lane.b32.xlu0 %v859, %s864
        %v866 = vpop.permute.xlu0 %865
        %v867 = vlaneseq
        %v868 = vshrl.u32 %v867, 7
        %v869 = vsub.s32 0, %v868
        %v870 = vrot.slane %v776, %v869
        %872 = vbcast.lane.b32.xlu0 %v870, 256
        %v873 = vpop.permute.xlu0 %872
        %s875 = sor.u32 256, 8
        %876 = vbcast.lane.b32.xlu0 %v870, %s875
        %v877 = vpop.permute.xlu0 %876
        %v878 = vlaneseq
        %v879 = vshrl.u32 %v878, 7
        %v880 = vsub.s32 1, %v879
        %v881 = vrot.slane %v776, %v880
        %883 = vbcast.lane.b32.xlu0 %v881, 256
        %v884 = vpop.permute.xlu0 %883
        %s886 = sor.u32 256, 8
        %887 = vbcast.lane.b32.xlu0 %v881, %s886
        %v888 = vpop.permute.xlu0 %887
        %v889 = vlaneseq
        %v890 = vshrl.u32 %v889, 7
        %v891 = vsub.s32 2, %v890
        %v892 = vrot.slane %v776, %v891
        %894 = vbcast.lane.b32.xlu0 %v892, 256
        %v895 = vpop.permute.xlu0 %894
        %s897 = sor.u32 256, 8
        %898 = vbcast.lane.b32.xlu0 %v892, %s897
        %v899 = vpop.permute.xlu0 %898
        %v900 = vlaneseq
        %v901 = vshrl.u32 %v900, 7
        %v902 = vsub.s32 3, %v901
        %v903 = vrot.slane %v776, %v902
        %905 = vbcast.lane.b32.xlu0 %v903, 256
        %v906 = vpop.permute.xlu0 %905
        %s908 = sor.u32 256, 8
        %909 = vbcast.lane.b32.xlu0 %v903, %s908
        %v910 = vpop.permute.xlu0 %909
        %v911 = vlaneseq
        %v912 = vshrl.u32 %v911, 7
        %v913 = vsub.s32 4, %v912
        %v914 = vrot.slane %v776, %v913
        %916 = vbcast.lane.b32.xlu0 %v914, 256
        %v917 = vpop.permute.xlu0 %916
        %s919 = sor.u32 256, 8
        %920 = vbcast.lane.b32.xlu0 %v914, %s919
        %v921 = vpop.permute.xlu0 %920
        %v922 = vlaneseq
        %v923 = vshrl.u32 %v922, 7
        %v924 = vsub.s32 5, %v923
        %v925 = vrot.slane %v776, %v924
        %927 = vbcast.lane.b32.xlu0 %v925, 256
        %v928 = vpop.permute.xlu0 %927
        %s930 = sor.u32 256, 8
        %931 = vbcast.lane.b32.xlu0 %v925, %s930
        %v932 = vpop.permute.xlu0 %931
        %v933 = vlaneseq
        %v934 = vshrl.u32 %v933, 7
        %v935 = vsub.s32 6, %v934
        %v936 = vrot.slane %v776, %v935
        %938 = vbcast.lane.b32.xlu0 %v936, 256
        %v939 = vpop.permute.xlu0 %938
        %s941 = sor.u32 256, 8
        %942 = vbcast.lane.b32.xlu0 %v936, %s941
        %v943 = vpop.permute.xlu0 %942
        %v944 = vlaneseq
        %v945 = vshrl.u32 %v944, 7
        %v946 = vsub.s32 7, %v945
        %v947 = vrot.slane %v776, %v946
        %949 = vbcast.lane.b32.xlu0 %v947, 256
        %v950 = vpop.permute.xlu0 %949
        %s952 = sor.u32 256, 8
        %953 = vbcast.lane.b32.xlu0 %v947, %s952
        %v954 = vpop.permute.xlu0 %953
        %v955 = vlaneseq
        %v956 = vshrl.u32 %v955, 7
        %v957 = vsub.s32 0, %v956
        %v958 = vrot.slane %v777, %v957
        %960 = vbcast.lane.b32.xlu0 %v958, 256
        %v961 = vpop.permute.xlu0 %960
        %s963 = sor.u32 256, 8
        %964 = vbcast.lane.b32.xlu0 %v958, %s963
        %v965 = vpop.permute.xlu0 %964
        %v966 = vlaneseq
        %v967 = vshrl.u32 %v966, 7
        %v968 = vsub.s32 1, %v967
        %v969 = vrot.slane %v777, %v968
        %971 = vbcast.lane.b32.xlu0 %v969, 256
        %v972 = vpop.permute.xlu0 %971
        %s974 = sor.u32 256, 8
        %975 = vbcast.lane.b32.xlu0 %v969, %s974
        %v976 = vpop.permute.xlu0 %975
        %v977 = vlaneseq
        %v978 = vshrl.u32 %v977, 7
        %v979 = vsub.s32 2, %v978
        %v980 = vrot.slane %v777, %v979
        %982 = vbcast.lane.b32.xlu0 %v980, 256
        %v983 = vpop.permute.xlu0 %982
        %s985 = sor.u32 256, 8
        %986 = vbcast.lane.b32.xlu0 %v980, %s985
        %v987 = vpop.permute.xlu0 %986
        %v988 = vlaneseq
        %v989 = vshrl.u32 %v988, 7
        %v990 = vsub.s32 3, %v989
        %v991 = vrot.slane %v777, %v990
        %993 = vbcast.lane.b32.xlu0 %v991, 256
        %v994 = vpop.permute.xlu0 %993
        %s996 = sor.u32 256, 8
        %997 = vbcast.lane.b32.xlu0 %v991, %s996
        %v998 = vpop.permute.xlu0 %997
        %v999 = vlaneseq
        %v1000 = vshrl.u32 %v999, 7
        %v1001 = vsub.s32 4, %v1000
        %v1002 = vrot.slane %v777, %v1001
        %1004 = vbcast.lane.b32.xlu0 %v1002, 256
        %v1005 = vpop.permute.xlu0 %1004
        %s1007 = sor.u32 256, 8
        %1008 = vbcast.lane.b32.xlu0 %v1002, %s1007
        %v1009 = vpop.permute.xlu0 %1008
        %v1010 = vlaneseq
        %v1011 = vshrl.u32 %v1010, 7
        %v1012 = vsub.s32 5, %v1011
        %v1013 = vrot.slane %v777, %v1012
        %1015 = vbcast.lane.b32.xlu0 %v1013, 256
        %v1016 = vpop.permute.xlu0 %1015
        %s1018 = sor.u32 256, 8
        %1019 = vbcast.lane.b32.xlu0 %v1013, %s1018
        %v1020 = vpop.permute.xlu0 %1019
        %v1021 = vlaneseq
        %v1022 = vshrl.u32 %v1021, 7
        %v1023 = vsub.s32 6, %v1022
        %v1024 = vrot.slane %v777, %v1023
        %1026 = vbcast.lane.b32.xlu0 %v1024, 256
        %v1027 = vpop.permute.xlu0 %1026
        %s1029 = sor.u32 256, 8
        %1030 = vbcast.lane.b32.xlu0 %v1024, %s1029
        %v1031 = vpop.permute.xlu0 %1030
        %v1032 = vlaneseq
        %v1033 = vshrl.u32 %v1032, 7
        %v1034 = vsub.s32 7, %v1033
        %v1035 = vrot.slane %v777, %v1034
        %1037 = vbcast.lane.b32.xlu0 %v1035, 256
        %v1038 = vpop.permute.xlu0 %1037
        %s1040 = sor.u32 256, 8
        %1041 = vbcast.lane.b32.xlu0 %v1035, %s1040
        %v1042 = vpop.permute.xlu0 %1041
        %v1043 = vlaneseq
        %v1044 = vshrl.u32 %v1043, 7
        %v1045 = vsub.s32 0, %v1044
        %v1046 = vrot.slane %v778, %v1045
        %1048 = vbcast.lane.b32.xlu0 %v1046, 256
        %v1049 = vpop.permute.xlu0 %1048
        %s1051 = sor.u32 256, 8
        %1052 = vbcast.lane.b32.xlu0 %v1046, %s1051
        %v1053 = vpop.permute.xlu0 %1052
        %v1054 = vlaneseq
        %v1055 = vshrl.u32 %v1054, 7
        %v1056 = vsub.s32 1, %v1055
        %v1057 = vrot.slane %v778, %v1056
        %1059 = vbcast.lane.b32.xlu0 %v1057, 256
        %v1060 = vpop.permute.xlu0 %1059
        %s1062 = sor.u32 256, 8
        %1063 = vbcast.lane.b32.xlu0 %v1057, %s1062
        %v1064 = vpop.permute.xlu0 %1063
        %v1065 = vlaneseq
        %v1066 = vshrl.u32 %v1065, 7
        %v1067 = vsub.s32 2, %v1066
        %v1068 = vrot.slane %v778, %v1067
        %1070 = vbcast.lane.b32.xlu0 %v1068, 256
        %v1071 = vpop.permute.xlu0 %1070
        %s1073 = sor.u32 256, 8
        %1074 = vbcast.lane.b32.xlu0 %v1068, %s1073
        %v1075 = vpop.permute.xlu0 %1074
        %v1076 = vlaneseq
        %v1077 = vshrl.u32 %v1076, 7
        %v1078 = vsub.s32 3, %v1077
        %v1079 = vrot.slane %v778, %v1078
        %1081 = vbcast.lane.b32.xlu0 %v1079, 256
        %v1082 = vpop.permute.xlu0 %1081
        %s1084 = sor.u32 256, 8
        %1085 = vbcast.lane.b32.xlu0 %v1079, %s1084
        %v1086 = vpop.permute.xlu0 %1085
        %v1087 = vlaneseq
        %v1088 = vshrl.u32 %v1087, 7
        %v1089 = vsub.s32 4, %v1088
        %v1090 = vrot.slane %v778, %v1089
        %1092 = vbcast.lane.b32.xlu0 %v1090, 256
        %v1093 = vpop.permute.xlu0 %1092
        %s1095 = sor.u32 256, 8
        %1096 = vbcast.lane.b32.xlu0 %v1090, %s1095
        %v1097 = vpop.permute.xlu0 %1096
        %v1098 = vlaneseq
        %v1099 = vshrl.u32 %v1098, 7
        %v1100 = vsub.s32 5, %v1099
        %v1101 = vrot.slane %v778, %v1100
        %1103 = vbcast.lane.b32.xlu0 %v1101, 256
        %v1104 = vpop.permute.xlu0 %1103
        %s1106 = sor.u32 256, 8
        %1107 = vbcast.lane.b32.xlu0 %v1101, %s1106
        %v1108 = vpop.permute.xlu0 %1107
        %v1109 = vlaneseq
        %v1110 = vshrl.u32 %v1109, 7
        %v1111 = vsub.s32 6, %v1110
        %v1112 = vrot.slane %v778, %v1111
        %1114 = vbcast.lane.b32.xlu0 %v1112, 256
        %v1115 = vpop.permute.xlu0 %1114
        %s1117 = sor.u32 256, 8
        %1118 = vbcast.lane.b32.xlu0 %v1112, %s1117
        %v1119 = vpop.permute.xlu0 %1118
        %v1120 = vlaneseq
        %v1121 = vshrl.u32 %v1120, 7
        %v1122 = vsub.s32 7, %v1121
        %v1123 = vrot.slane %v778, %v1122
        %1125 = vbcast.lane.b32.xlu0 %v1123, 256
        %v1126 = vpop.permute.xlu0 %1125
        %s1128 = sor.u32 256, 8
        %1129 = vbcast.lane.b32.xlu0 %v1123, %s1128
        %v1130 = vpop.permute.xlu0 %1129
        %v1131 = vmul.f32 %v707, %v785
        %v1132 = vmul.f32 %v708, %v789
        %v1133 = vmul.f32 %v709, %v796
        %v1134 = vmul.f32 %v710, %v800
        %v1135 = vmul.f32 %v711, %v807
        %v1136 = vmul.f32 %v712, %v811
        %v1137 = vmul.f32 %v713, %v818
        %v1138 = vmul.f32 %v714, %v822
        %v1139 = vmul.f32 %v715, %v829
        %v1140 = vmul.f32 %v716, %v833
        %v1141 = vmul.f32 %v717, %v840
        %v1142 = vmul.f32 %v718, %v844
        %v1143 = vmul.f32 %v719, %v851
        %v1144 = vmul.f32 %v720, %v855
        %v1145 = vmul.f32 %v721, %v862
        %v1146 = vmul.f32 %v722, %v866
        %v1147 = vmul.f32 %v723, %v873
        %v1148 = vmul.f32 %v724, %v877
        %v1149 = vmul.f32 %v725, %v884
        %v1150 = vmul.f32 %v726, %v888
        %v1151 = vmul.f32 %v727, %v895
        %v1152 = vmul.f32 %v728, %v899
        %v1153 = vmul.f32 %v729, %v906
        %v1154 = vmul.f32 %v730, %v910
        %v1155 = vmul.f32 %v731, %v917
        %v1156 = vmul.f32 %v732, %v921
        %v1157 = vmul.f32 %v733, %v928
        %v1158 = vmul.f32 %v734, %v932
        %v1159 = vmul.f32 %v735, %v939
        %v1160 = vmul.f32 %v736, %v943
        %v1161 = vmul.f32 %v737, %v950
        %v1162 = vmul.f32 %v738, %v954
        %v1163 = vmul.f32 %v739, %v961
        %v1164 = vmul.f32 %v740, %v965
        %v1165 = vmul.f32 %v741, %v972
        %v1166 = vmul.f32 %v742, %v976
        %v1167 = vmul.f32 %v743, %v983
        %v1168 = vmul.f32 %v744, %v987
        %v1169 = vmul.f32 %v745, %v994
        %v1170 = vmul.f32 %v746, %v998
        %v1171 = vmul.f32 %v747, %v1005
        %v1172 = vmul.f32 %v748, %v1009
        %v1173 = vmul.f32 %v749, %v1016
        %v1174 = vmul.f32 %v750, %v1020
        %v1175 = vmul.f32 %v751, %v1027
        %v1176 = vmul.f32 %v752, %v1031
        %v1177 = vmul.f32 %v753, %v1038
        %v1178 = vmul.f32 %v754, %v1042
        %v1179 = vmul.f32 %v755, %v1049
        %v1180 = vmul.f32 %v756, %v1053
        %v1181 = vmul.f32 %v757, %v1060
        %v1182 = vmul.f32 %v758, %v1064
        %v1183 = vmul.f32 %v759, %v1071
        %v1184 = vmul.f32 %v760, %v1075
        %v1185 = vmul.f32 %v761, %v1082
        %v1186 = vmul.f32 %v762, %v1086
        %v1187 = vmul.f32 %v763, %v1093
        %v1188 = vmul.f32 %v764, %v1097
        %v1189 = vmul.f32 %v765, %v1104
        %v1190 = vmul.f32 %v766, %v1108
        %v1191 = vmul.f32 %v767, %v1115
        %v1192 = vmul.f32 %v768, %v1119
        %v1193 = vmul.f32 %v769, %v1126
        %v1194 = vmul.f32 %v770, %v1130
        %v1195 = vadd.f32 %v1131, %v1132
        %v1196 = vrot.slane %v1195, 4
        %v1197 = vadd.f32 %v1195, %v1196
        %v1198 = vrot.slane %v1197, 2
        %v1199 = vadd.f32 %v1197, %v1198
        %v1200 = vrot.slane %v1199, 1
        %v1201 = vadd.f32 %v1199, %v1200
        %v1202 = vadd.f32 %v1133, %v1134
        %v1203 = vrot.slane %v1202, 4
        %v1204 = vadd.f32 %v1202, %v1203
        %v1205 = vrot.slane %v1204, 2
        %v1206 = vadd.f32 %v1204, %v1205
        %v1207 = vrot.slane %v1206, 1
        %v1208 = vadd.f32 %v1206, %v1207
        %v1209 = vadd.f32 %v1135, %v1136
        %v1210 = vrot.slane %v1209, 4
        %v1211 = vadd.f32 %v1209, %v1210
        %v1212 = vrot.slane %v1211, 2
        %v1213 = vadd.f32 %v1211, %v1212
        %v1214 = vrot.slane %v1213, 1
        %v1215 = vadd.f32 %v1213, %v1214
        %v1216 = vadd.f32 %v1137, %v1138
        %v1217 = vrot.slane %v1216, 4
        %v1218 = vadd.f32 %v1216, %v1217
        %v1219 = vrot.slane %v1218, 2
        %v1220 = vadd.f32 %v1218, %v1219
        %v1221 = vrot.slane %v1220, 1
        %v1222 = vadd.f32 %v1220, %v1221
        %v1223 = vadd.f32 %v1139, %v1140
        %v1224 = vrot.slane %v1223, 4
        %v1225 = vadd.f32 %v1223, %v1224
        %v1226 = vrot.slane %v1225, 2
        %v1227 = vadd.f32 %v1225, %v1226
        %v1228 = vrot.slane %v1227, 1
        %v1229 = vadd.f32 %v1227, %v1228
        %v1230 = vadd.f32 %v1141, %v1142
        %v1231 = vrot.slane %v1230, 4
        %v1232 = vadd.f32 %v1230, %v1231
        %v1233 = vrot.slane %v1232, 2
        %v1234 = vadd.f32 %v1232, %v1233
        %v1235 = vrot.slane %v1234, 1
        %v1236 = vadd.f32 %v1234, %v1235
        %v1237 = vadd.f32 %v1143, %v1144
        %v1238 = vrot.slane %v1237, 4
        %v1239 = vadd.f32 %v1237, %v1238
        %v1240 = vrot.slane %v1239, 2
        %v1241 = vadd.f32 %v1239, %v1240
        %v1242 = vrot.slane %v1241, 1
        %v1243 = vadd.f32 %v1241, %v1242
        %v1244 = vadd.f32 %v1145, %v1146
        %v1245 = vrot.slane %v1244, 4
        %v1246 = vadd.f32 %v1244, %v1245
        %v1247 = vrot.slane %v1246, 2
        %v1248 = vadd.f32 %v1246, %v1247
        %v1249 = vrot.slane %v1248, 1
        %v1250 = vadd.f32 %v1248, %v1249
        %v1251 = vadd.f32 %v1147, %v1148
        %v1252 = vrot.slane %v1251, 4
        %v1253 = vadd.f32 %v1251, %v1252
        %v1254 = vrot.slane %v1253, 2
        %v1255 = vadd.f32 %v1253, %v1254
        %v1256 = vrot.slane %v1255, 1
        %v1257 = vadd.f32 %v1255, %v1256
        %v1258 = vadd.f32 %v1149, %v1150
        %v1259 = vrot.slane %v1258, 4
        %v1260 = vadd.f32 %v1258, %v1259
        %v1261 = vrot.slane %v1260, 2
        %v1262 = vadd.f32 %v1260, %v1261
        %v1263 = vrot.slane %v1262, 1
        %v1264 = vadd.f32 %v1262, %v1263
        %v1265 = vadd.f32 %v1151, %v1152
        %v1266 = vrot.slane %v1265, 4
        %v1267 = vadd.f32 %v1265, %v1266
        %v1268 = vrot.slane %v1267, 2
        %v1269 = vadd.f32 %v1267, %v1268
        %v1270 = vrot.slane %v1269, 1
        %v1271 = vadd.f32 %v1269, %v1270
        %v1272 = vadd.f32 %v1153, %v1154
        %v1273 = vrot.slane %v1272, 4
        %v1274 = vadd.f32 %v1272, %v1273
        %v1275 = vrot.slane %v1274, 2
        %v1276 = vadd.f32 %v1274, %v1275
        %v1277 = vrot.slane %v1276, 1
        %v1278 = vadd.f32 %v1276, %v1277
        %v1279 = vadd.f32 %v1155, %v1156
        %v1280 = vrot.slane %v1279, 4
        %v1281 = vadd.f32 %v1279, %v1280
        %v1282 = vrot.slane %v1281, 2
        %v1283 = vadd.f32 %v1281, %v1282
        %v1284 = vrot.slane %v1283, 1
        %v1285 = vadd.f32 %v1283, %v1284
        %v1286 = vadd.f32 %v1157, %v1158
        %v1287 = vrot.slane %v1286, 4
        %v1288 = vadd.f32 %v1286, %v1287
        %v1289 = vrot.slane %v1288, 2
        %v1290 = vadd.f32 %v1288, %v1289
        %v1291 = vrot.slane %v1290, 1
        %v1292 = vadd.f32 %v1290, %v1291
        %v1293 = vadd.f32 %v1159, %v1160
        %v1294 = vrot.slane %v1293, 4
        %v1295 = vadd.f32 %v1293, %v1294
        %v1296 = vrot.slane %v1295, 2
        %v1297 = vadd.f32 %v1295, %v1296
        %v1298 = vrot.slane %v1297, 1
        %v1299 = vadd.f32 %v1297, %v1298
        %v1300 = vadd.f32 %v1161, %v1162
        %v1301 = vrot.slane %v1300, 4
        %v1302 = vadd.f32 %v1300, %v1301
        %v1303 = vrot.slane %v1302, 2
        %v1304 = vadd.f32 %v1302, %v1303
        %v1305 = vrot.slane %v1304, 1
        %v1306 = vadd.f32 %v1304, %v1305
        %v1307 = vadd.f32 %v1163, %v1164
        %v1308 = vrot.slane %v1307, 4
        %v1309 = vadd.f32 %v1307, %v1308
        %v1310 = vrot.slane %v1309, 2
        %v1311 = vadd.f32 %v1309, %v1310
        %v1312 = vrot.slane %v1311, 1
        %v1313 = vadd.f32 %v1311, %v1312
        %v1314 = vadd.f32 %v1165, %v1166
        %v1315 = vrot.slane %v1314, 4
        %v1316 = vadd.f32 %v1314, %v1315
        %v1317 = vrot.slane %v1316, 2
        %v1318 = vadd.f32 %v1316, %v1317
        %v1319 = vrot.slane %v1318, 1
        %v1320 = vadd.f32 %v1318, %v1319
        %v1321 = vadd.f32 %v1167, %v1168
        %v1322 = vrot.slane %v1321, 4
        %v1323 = vadd.f32 %v1321, %v1322
        %v1324 = vrot.slane %v1323, 2
        %v1325 = vadd.f32 %v1323, %v1324
        %v1326 = vrot.slane %v1325, 1
        %v1327 = vadd.f32 %v1325, %v1326
        %v1328 = vadd.f32 %v1169, %v1170
        %v1329 = vrot.slane %v1328, 4
        %v1330 = vadd.f32 %v1328, %v1329
        %v1331 = vrot.slane %v1330, 2
        %v1332 = vadd.f32 %v1330, %v1331
        %v1333 = vrot.slane %v1332, 1
        %v1334 = vadd.f32 %v1332, %v1333
        %v1335 = vadd.f32 %v1171, %v1172
        %v1336 = vrot.slane %v1335, 4
        %v1337 = vadd.f32 %v1335, %v1336
        %v1338 = vrot.slane %v1337, 2
        %v1339 = vadd.f32 %v1337, %v1338
        %v1340 = vrot.slane %v1339, 1
        %v1341 = vadd.f32 %v1339, %v1340
        %v1342 = vadd.f32 %v1173, %v1174
        %v1343 = vrot.slane %v1342, 4
        %v1344 = vadd.f32 %v1342, %v1343
        %v1345 = vrot.slane %v1344, 2
        %v1346 = vadd.f32 %v1344, %v1345
        %v1347 = vrot.slane %v1346, 1
        %v1348 = vadd.f32 %v1346, %v1347
        %v1349 = vadd.f32 %v1175, %v1176
        %v1350 = vrot.slane %v1349, 4
        %v1351 = vadd.f32 %v1349, %v1350
        %v1352 = vrot.slane %v1351, 2
        %v1353 = vadd.f32 %v1351, %v1352
        %v1354 = vrot.slane %v1353, 1
        %v1355 = vadd.f32 %v1353, %v1354
        %v1356 = vadd.f32 %v1177, %v1178
        %v1357 = vrot.slane %v1356, 4
        %v1358 = vadd.f32 %v1356, %v1357
        %v1359 = vrot.slane %v1358, 2
        %v1360 = vadd.f32 %v1358, %v1359
        %v1361 = vrot.slane %v1360, 1
        %v1362 = vadd.f32 %v1360, %v1361
        %v1363 = vadd.f32 %v1179, %v1180
        %v1364 = vrot.slane %v1363, 4
        %v1365 = vadd.f32 %v1363, %v1364
        %v1366 = vrot.slane %v1365, 2
        %v1367 = vadd.f32 %v1365, %v1366
        %v1368 = vrot.slane %v1367, 1
        %v1369 = vadd.f32 %v1367, %v1368
        %v1370 = vadd.f32 %v1181, %v1182
        %v1371 = vrot.slane %v1370, 4
        %v1372 = vadd.f32 %v1370, %v1371
        %v1373 = vrot.slane %v1372, 2
        %v1374 = vadd.f32 %v1372, %v1373
        %v1375 = vrot.slane %v1374, 1
        %v1376 = vadd.f32 %v1374, %v1375
        %v1377 = vadd.f32 %v1183, %v1184
        %v1378 = vrot.slane %v1377, 4
        %v1379 = vadd.f32 %v1377, %v1378
        %v1380 = vrot.slane %v1379, 2
        %v1381 = vadd.f32 %v1379, %v1380
        %v1382 = vrot.slane %v1381, 1
        %v1383 = vadd.f32 %v1381, %v1382
        %v1384 = vadd.f32 %v1185, %v1186
        %v1385 = vrot.slane %v1384, 4
        %v1386 = vadd.f32 %v1384, %v1385
        %v1387 = vrot.slane %v1386, 2
        %v1388 = vadd.f32 %v1386, %v1387
        %v1389 = vrot.slane %v1388, 1
        %v1390 = vadd.f32 %v1388, %v1389
        %v1391 = vadd.f32 %v1187, %v1188
        %v1392 = vrot.slane %v1391, 4
        %v1393 = vadd.f32 %v1391, %v1392
        %v1394 = vrot.slane %v1393, 2
        %v1395 = vadd.f32 %v1393, %v1394
        %v1396 = vrot.slane %v1395, 1
        %v1397 = vadd.f32 %v1395, %v1396
        %v1398 = vadd.f32 %v1189, %v1190
        %v1399 = vrot.slane %v1398, 4
        %v1400 = vadd.f32 %v1398, %v1399
        %v1401 = vrot.slane %v1400, 2
        %v1402 = vadd.f32 %v1400, %v1401
        %v1403 = vrot.slane %v1402, 1
        %v1404 = vadd.f32 %v1402, %v1403
        %v1405 = vadd.f32 %v1191, %v1192
        %v1406 = vrot.slane %v1405, 4
        %v1407 = vadd.f32 %v1405, %v1406
        %v1408 = vrot.slane %v1407, 2
        %v1409 = vadd.f32 %v1407, %v1408
        %v1410 = vrot.slane %v1409, 1
        %v1411 = vadd.f32 %v1409, %v1410
        %v1412 = vadd.f32 %v1193, %v1194
        %v1413 = vrot.slane %v1412, 4
        %v1414 = vadd.f32 %v1412, %v1413
        %v1415 = vrot.slane %v1414, 2
        %v1416 = vadd.f32 %v1414, %v1415
        %v1417 = vrot.slane %v1416, 1
        %v1418 = vadd.f32 %v1416, %v1417
        %vm1419 = vcmask 130048
        %v1420 = vsel %vm1419, %v775, 0.0
        %1421 = vadd.xlane.f32.xlu0 %v1420
        %v1422 = vpop.xlane.xlu0 %1421
        %v1423 = vsel %vm1419, %v776, 0.0
        %1424 = vadd.xlane.f32.xlu0 %v1423
        %v1425 = vpop.xlane.xlu0 %1424
        %v1426 = vsel %vm1419, %v777, 0.0
        %1427 = vadd.xlane.f32.xlu0 %v1426
        %v1428 = vpop.xlane.xlu0 %1427
        %v1429 = vsel %vm1419, %v778, 0.0
        %1430 = vadd.xlane.f32.xlu0 %v1429
        %v1431 = vpop.xlane.xlu0 %1430
        %v1432 = vmax.f32 %v1422, 1.0
        %v1433 = vmax.f32 %v1425, 1.0
        %v1434 = vmax.f32 %v1428, 1.0
        %v1435 = vmax.f32 %v1431, 1.0
        %v1436 = vrcp.pop %v1432
        %v1437 = vrcp.pop %v1433
        %v1438 = vrcp.pop %v1434
        %v1439 = vrcp.pop %v1435
        %v1444 = vrot.slane %v1436, 1
        %v1445 = vrot.slane %v1436, 2
        %v1446 = vrot.slane %v1436, 3
        %v1447 = vrot.slane %v1436, 4
        %v1448 = vrot.slane %v1436, 5
        %v1449 = vrot.slane %v1436, 6
        %v1450 = vrot.slane %v1436, 7
        %v1451 = vrot.slane %v1437, 1
        %v1452 = vrot.slane %v1437, 2
        %v1453 = vrot.slane %v1437, 3
        %v1454 = vrot.slane %v1437, 4
        %v1455 = vrot.slane %v1437, 5
        %v1456 = vrot.slane %v1437, 6
        %v1457 = vrot.slane %v1437, 7
        %v1458 = vrot.slane %v1438, 1
        %v1459 = vrot.slane %v1438, 2
        %v1460 = vrot.slane %v1438, 3
        %v1461 = vrot.slane %v1438, 4
        %v1462 = vrot.slane %v1438, 5
        %v1463 = vrot.slane %v1438, 6
        %v1464 = vrot.slane %v1438, 7
        %v1465 = vrot.slane %v1439, 1
        %v1466 = vrot.slane %v1439, 2
        %v1467 = vrot.slane %v1439, 3
        %v1468 = vrot.slane %v1439, 4
        %v1469 = vrot.slane %v1439, 5
        %v1470 = vrot.slane %v1439, 6
        %v1471 = vrot.slane %v1439, 7
        %v1504 = vmul.f32 %v1201, %v1436
        %v1505 = vmul.f32 %v1208, %v1444
        %v1506 = vmul.f32 %v1215, %v1445
        %v1507 = vmul.f32 %v1222, %v1446
        %v1508 = vmul.f32 %v1229, %v1447
        %v1509 = vmul.f32 %v1236, %v1448
        %v1510 = vmul.f32 %v1243, %v1449
        %v1511 = vmul.f32 %v1250, %v1450
        %v1512 = vmul.f32 %v1257, %v1437
        %v1513 = vmul.f32 %v1264, %v1451
        %v1514 = vmul.f32 %v1271, %v1452
        %v1515 = vmul.f32 %v1278, %v1453
        %v1516 = vmul.f32 %v1285, %v1454
        %v1517 = vmul.f32 %v1292, %v1455
        %v1518 = vmul.f32 %v1299, %v1456
        %v1519 = vmul.f32 %v1306, %v1457
        %v1520 = vmul.f32 %v1313, %v1438
        %v1521 = vmul.f32 %v1320, %v1458
        %v1522 = vmul.f32 %v1327, %v1459
        %v1523 = vmul.f32 %v1334, %v1460
        %v1524 = vmul.f32 %v1341, %v1461
        %v1525 = vmul.f32 %v1348, %v1462
        %v1526 = vmul.f32 %v1355, %v1463
        %v1527 = vmul.f32 %v1362, %v1464
        %v1528 = vmul.f32 %v1369, %v1439
        %v1529 = vmul.f32 %v1376, %v1465
        %v1530 = vmul.f32 %v1383, %v1466
        %v1531 = vmul.f32 %v1390, %v1467
        %v1532 = vmul.f32 %v1397, %v1468
        %v1533 = vmul.f32 %v1404, %v1469
        %v1534 = vmul.f32 %v1411, %v1470
        %v1535 = vmul.f32 %v1418, %v1471
        %v1536 = vmul.f32 %v1504, %v1504
        %v1537 = vmul.f32 %v1505, %v1505
        %v1538 = vmul.f32 %v1506, %v1506
        %v1539 = vmul.f32 %v1507, %v1507
        %v1540 = vmul.f32 %v1508, %v1508
        %v1541 = vmul.f32 %v1509, %v1509
        %v1542 = vmul.f32 %v1510, %v1510
        %v1543 = vmul.f32 %v1511, %v1511
        %v1544 = vmul.f32 %v1512, %v1512
        %v1545 = vmul.f32 %v1513, %v1513
        %v1546 = vmul.f32 %v1514, %v1514
        %v1547 = vmul.f32 %v1515, %v1515
        %v1548 = vmul.f32 %v1516, %v1516
        %v1549 = vmul.f32 %v1517, %v1517
        %v1550 = vmul.f32 %v1518, %v1518
        %v1551 = vmul.f32 %v1519, %v1519
        %v1552 = vmul.f32 %v1520, %v1520
        %v1553 = vmul.f32 %v1521, %v1521
        %v1554 = vmul.f32 %v1522, %v1522
        %v1555 = vmul.f32 %v1523, %v1523
        %v1556 = vmul.f32 %v1524, %v1524
        %v1557 = vmul.f32 %v1525, %v1525
        %v1558 = vmul.f32 %v1526, %v1526
        %v1559 = vmul.f32 %v1527, %v1527
        %v1560 = vmul.f32 %v1528, %v1528
        %v1561 = vmul.f32 %v1529, %v1529
        %v1562 = vmul.f32 %v1530, %v1530
        %v1563 = vmul.f32 %v1531, %v1531
        %v1564 = vmul.f32 %v1532, %v1532
        %v1565 = vmul.f32 %v1533, %v1533
        %v1566 = vmul.f32 %v1534, %v1534
        %v1567 = vmul.f32 %v1535, %v1535
        %v1600 = vrot.slane %v1537, 7
        %vm1601 = vcmask 1041409
        %v1602 = vsel %vm1601, %v1600, %v1536
        %v1603 = vrot.slane %v1538, 6
        %vm1604 = vcmask 1042434
        %v1605 = vsel %vm1604, %v1603, %v1602
        %v1606 = vrot.slane %v1539, 5
        %vm1607 = vcmask 1043459
        %v1608 = vsel %vm1607, %v1606, %v1605
        %v1609 = vrot.slane %v1540, 4
        %vm1610 = vcmask 1044484
        %v1611 = vsel %vm1610, %v1609, %v1608
        %v1612 = vrot.slane %v1541, 3
        %vm1613 = vcmask 1045509
        %v1614 = vsel %vm1613, %v1612, %v1611
        %v1615 = vrot.slane %v1542, 2
        %vm1616 = vcmask 1046534
        %v1617 = vsel %vm1616, %v1615, %v1614
        %v1618 = vrot.slane %v1543, 1
        %vm1619 = vcmask 1047559
        %v1620 = vsel %vm1619, %v1618, %v1617
        %v1621 = vrot.slane %v1545, 7
        %v1622 = vsel %vm1601, %v1621, %v1544
        %v1623 = vrot.slane %v1546, 6
        %v1624 = vsel %vm1604, %v1623, %v1622
        %v1625 = vrot.slane %v1547, 5
        %v1626 = vsel %vm1607, %v1625, %v1624
        %v1627 = vrot.slane %v1548, 4
        %v1628 = vsel %vm1610, %v1627, %v1626
        %v1629 = vrot.slane %v1549, 3
        %v1630 = vsel %vm1613, %v1629, %v1628
        %v1631 = vrot.slane %v1550, 2
        %v1632 = vsel %vm1616, %v1631, %v1630
        %v1633 = vrot.slane %v1551, 1
        %v1634 = vsel %vm1619, %v1633, %v1632
        %v1635 = vrot.slane %v1553, 7
        %v1636 = vsel %vm1601, %v1635, %v1552
        %v1637 = vrot.slane %v1554, 6
        %v1638 = vsel %vm1604, %v1637, %v1636
        %v1639 = vrot.slane %v1555, 5
        %v1640 = vsel %vm1607, %v1639, %v1638
        %v1641 = vrot.slane %v1556, 4
        %v1642 = vsel %vm1610, %v1641, %v1640
        %v1643 = vrot.slane %v1557, 3
        %v1644 = vsel %vm1613, %v1643, %v1642
        %v1645 = vrot.slane %v1558, 2
        %v1646 = vsel %vm1616, %v1645, %v1644
        %v1647 = vrot.slane %v1559, 1
        %v1648 = vsel %vm1619, %v1647, %v1646
        %v1649 = vrot.slane %v1561, 7
        %v1650 = vsel %vm1601, %v1649, %v1560
        %v1651 = vrot.slane %v1562, 6
        %v1652 = vsel %vm1604, %v1651, %v1650
        %v1653 = vrot.slane %v1563, 5
        %v1654 = vsel %vm1607, %v1653, %v1652
        %v1655 = vrot.slane %v1564, 4
        %v1656 = vsel %vm1610, %v1655, %v1654
        %v1657 = vrot.slane %v1565, 3
        %v1658 = vsel %vm1613, %v1657, %v1656
        %v1659 = vrot.slane %v1566, 2
        %v1660 = vsel %vm1616, %v1659, %v1658
        %v1661 = vrot.slane %v1567, 1
        %v1662 = vsel %vm1619, %v1661, %v1660
        %1667 = vadd.xlane.f32.xlu0 %v1620
        %v1668 = vpop.xlane.xlu0 %1667
        %1669 = vadd.xlane.f32.xlu0 %v1634
        %v1670 = vpop.xlane.xlu0 %1669
        %1671 = vadd.xlane.f32.xlu0 %v1648
        %v1672 = vpop.xlane.xlu0 %1671
        %1673 = vadd.xlane.f32.xlu0 %v1662
        %v1674 = vpop.xlane.xlu0 %1673
        %v1675 = vmax.f32 %v1668, 1e-24
        %v1676 = vmax.f32 %v1670, 1e-24
        %v1677 = vmax.f32 %v1672, 1e-24
        %v1678 = vmax.f32 %v1674, 1e-24
        %v1679 = vrsqrt.pop %v1675
        %v1680 = vrsqrt.pop %v1676
        %v1681 = vrsqrt.pop %v1677
        %v1682 = vrsqrt.pop %v1678
        %v1687 = vrot.slane %v1679, 1
        %v1688 = vrot.slane %v1679, 2
        %v1689 = vrot.slane %v1679, 3
        %v1690 = vrot.slane %v1679, 4
        %v1691 = vrot.slane %v1679, 5
        %v1692 = vrot.slane %v1679, 6
        %v1693 = vrot.slane %v1679, 7
        %v1694 = vrot.slane %v1680, 1
        %v1695 = vrot.slane %v1680, 2
        %v1696 = vrot.slane %v1680, 3
        %v1697 = vrot.slane %v1680, 4
        %v1698 = vrot.slane %v1680, 5
        %v1699 = vrot.slane %v1680, 6
        %v1700 = vrot.slane %v1680, 7
        %v1701 = vrot.slane %v1681, 1
        %v1702 = vrot.slane %v1681, 2
        %v1703 = vrot.slane %v1681, 3
        %v1704 = vrot.slane %v1681, 4
        %v1705 = vrot.slane %v1681, 5
        %v1706 = vrot.slane %v1681, 6
        %v1707 = vrot.slane %v1681, 7
        %v1708 = vrot.slane %v1682, 1
        %v1709 = vrot.slane %v1682, 2
        %v1710 = vrot.slane %v1682, 3
        %v1711 = vrot.slane %v1682, 4
        %v1712 = vrot.slane %v1682, 5
        %v1713 = vrot.slane %v1682, 6
        %v1714 = vrot.slane %v1682, 7
        %v1747 = vmul.f32 %v1504, %v1679
        %v1748 = vmul.f32 %v1505, %v1687
        %v1749 = vmul.f32 %v1506, %v1688
        %v1750 = vmul.f32 %v1507, %v1689
        %v1751 = vmul.f32 %v1508, %v1690
        %v1752 = vmul.f32 %v1509, %v1691
        %v1753 = vmul.f32 %v1510, %v1692
        %v1754 = vmul.f32 %v1511, %v1693
        %v1755 = vmul.f32 %v1512, %v1680
        %v1756 = vmul.f32 %v1513, %v1694
        %v1757 = vmul.f32 %v1514, %v1695
        %v1758 = vmul.f32 %v1515, %v1696
        %v1759 = vmul.f32 %v1516, %v1697
        %v1760 = vmul.f32 %v1517, %v1698
        %v1761 = vmul.f32 %v1518, %v1699
        %v1762 = vmul.f32 %v1519, %v1700
        %v1763 = vmul.f32 %v1520, %v1681
        %v1764 = vmul.f32 %v1521, %v1701
        %v1765 = vmul.f32 %v1522, %v1702
        %v1766 = vmul.f32 %v1523, %v1703
        %v1767 = vmul.f32 %v1524, %v1704
        %v1768 = vmul.f32 %v1525, %v1705
        %v1769 = vmul.f32 %v1526, %v1706
        %v1770 = vmul.f32 %v1527, %v1707
        %v1771 = vmul.f32 %v1528, %v1682
        %v1772 = vmul.f32 %v1529, %v1708
        %v1773 = vmul.f32 %v1530, %v1709
        %v1774 = vmul.f32 %v1531, %v1710
        %v1775 = vmul.f32 %v1532, %v1711
        %v1776 = vmul.f32 %v1533, %v1712
        %v1777 = vmul.f32 %v1534, %v1713
        %v1778 = vmul.f32 %v1535, %v1714
        %v1811 = vrot.slane %v1748, 7
        %v1812 = vsel %vm1601, %v1811, %v1747
        %v1813 = vrot.slane %v1749, 6
        %v1814 = vsel %vm1604, %v1813, %v1812
        %v1815 = vrot.slane %v1750, 5
        %v1816 = vsel %vm1607, %v1815, %v1814
        %v1817 = vrot.slane %v1751, 4
        %v1818 = vsel %vm1610, %v1817, %v1816
        %v1819 = vrot.slane %v1752, 3
        %v1820 = vsel %vm1613, %v1819, %v1818
        %v1821 = vrot.slane %v1753, 2
        %v1822 = vsel %vm1616, %v1821, %v1820
        %v1823 = vrot.slane %v1754, 1
        %v1824 = vsel %vm1619, %v1823, %v1822
        %v1825 = vrot.slane %v1756, 7
        %v1826 = vsel %vm1601, %v1825, %v1755
        %v1827 = vrot.slane %v1757, 6
        %v1828 = vsel %vm1604, %v1827, %v1826
        %v1829 = vrot.slane %v1758, 5
        %v1830 = vsel %vm1607, %v1829, %v1828
        %v1831 = vrot.slane %v1759, 4
        %v1832 = vsel %vm1610, %v1831, %v1830
        %v1833 = vrot.slane %v1760, 3
        %v1834 = vsel %vm1613, %v1833, %v1832
        %v1835 = vrot.slane %v1761, 2
        %v1836 = vsel %vm1616, %v1835, %v1834
        %v1837 = vrot.slane %v1762, 1
        %v1838 = vsel %vm1619, %v1837, %v1836
        %v1839 = vrot.slane %v1764, 7
        %v1840 = vsel %vm1601, %v1839, %v1763
        %v1841 = vrot.slane %v1765, 6
        %v1842 = vsel %vm1604, %v1841, %v1840
        %v1843 = vrot.slane %v1766, 5
        %v1844 = vsel %vm1607, %v1843, %v1842
        %v1845 = vrot.slane %v1767, 4
        %v1846 = vsel %vm1610, %v1845, %v1844
        %v1847 = vrot.slane %v1768, 3
        %v1848 = vsel %vm1613, %v1847, %v1846
        %v1849 = vrot.slane %v1769, 2
        %v1850 = vsel %vm1616, %v1849, %v1848
        %v1851 = vrot.slane %v1770, 1
        %v1852 = vsel %vm1619, %v1851, %v1850
        %v1853 = vrot.slane %v1772, 7
        %v1854 = vsel %vm1601, %v1853, %v1771
        %v1855 = vrot.slane %v1773, 6
        %v1856 = vsel %vm1604, %v1855, %v1854
        %v1857 = vrot.slane %v1774, 5
        %v1858 = vsel %vm1607, %v1857, %v1856
        %v1859 = vrot.slane %v1775, 4
        %v1860 = vsel %vm1610, %v1859, %v1858
        %v1861 = vrot.slane %v1776, 3
        %v1862 = vsel %vm1613, %v1861, %v1860
        %v1863 = vrot.slane %v1777, 2
        %v1864 = vsel %vm1616, %v1863, %v1862
        %v1865 = vrot.slane %v1778, 1
        %v1866 = vsel %vm1619, %v1865, %v1864
        %1871 = vst [vmem:[%s172] sm:$0xff] %v1824
        %1872 = vst [vmem:[%s172 + $0x8] sm:$0xff] %v1838
        %1873 = vst [vmem:[%s172 + $0x10] sm:$0xff] %v1852
        %1874 = vst [vmem:[%s172 + $0x18] sm:$0xff] %v1866
        %s1875 = sand.u32 %s101, 1
        %s1876 = scalar_lea.sflag [#allocation7], %s1875
        %s1877 = sand.u32 %s101, 1
        %s1878 = smul.addr %s1877, 32
        %s1879 = scalar_lea.vmem [#allocation6], %s1878
        // Predicated region
        $region70: #{tpu_custom_call.1} parent=31 // pred_check
          %p1880 = pneg %p111
        $region71: #{tpu_custom_call.1} parent=31 // pred_check_branch
          %1882 = sbr.rel (%p1880) target = $region73
        $region72: #{tpu_custom_call.1} parent=31 // pred_region
          %s1883 = smul.u32 4, %s25
          %s1885 = ssub.s32 512, 512
          %1886 = vsyncadd %s1876, %s1885
          %s1887 = smul.addr %s1883, 128
          %s1888 = scalar_lea.hbm %s5, %s1887
          %s1889 = sshll.u32 %s1879, 4
          %s1890 = int_to_ptr.vmem [resolvable:$true] %s1889
          %1895 = dma.vmem_to_hbm [thread:$0]  %s1890, 512, %s1888, %s1876, 128, 128, 8
        $region73: #{tpu_custom_call.1} parent=31 // pred_fallthru
          _
      $region32: #{tpu_custom_call.1} parent=5 // pred_fallthru
        _
      %p1896 = scmp.le.s32.totalorder 2, %s20
      // Predicated region
      $region74: #{tpu_custom_call.1} parent=5 // pred_check
        %p1897 = pneg %p1896
      $region75: #{tpu_custom_call.1} parent=5 // pred_check_branch
        %1899 = sbr.rel (%p1897) target = $region77
      $region76: #{tpu_custom_call.1} parent=5 // pred_region
        %s1900 = ssub.s32 %s20, 2
        // Predicated region
        $region78: #{tpu_custom_call.1} parent=76 // pred_check
          %p1901 = pneg %p117
        $region79: #{tpu_custom_call.1} parent=76 // pred_check_branch
          %1903 = sbr.rel (%p1901) target = $region81
        $region80: #{tpu_custom_call.1} parent=76 // pred_region
          %s1904 = sand.u32 %s102, 1
          %s1905 = scalar_lea.sflag [#allocation7], %s1904
          %s1906 = sand.u32 %s102, 1
          %s1907 = smul.addr %s1906, 32
          %s1908 = scalar_lea.vmem [#allocation6], %s1907
          %1909 = dma.done %s1905, 512
        $region81: #{tpu_custom_call.1} parent=76 // pred_fallthru
          _
      $region77: #{tpu_custom_call.1} parent=5 // pred_fallthru
        _
    $region6: #{tpu_custom_call.1} parent=1 // loop_footer
      %s24 = sadd.s32 1, %s20
    $region7: #{tpu_custom_call.1} parent=1 // loop_footer_branch
      %19 = sbr.rel target = $region3
    $region8: #{tpu_custom_call.1} parent=1 // loop_exit
      _
    %1910 = vsyncpa [#allocation7], 1
    %s1911 = scalar_lea.sflag [#allocation7], 1
    %1912 = vsyncpa %s1911, 1
  %1913 = vsyncmov [#allocation3]
  %s1914 = vpop.sfrf %1913
  %p1915 = scmp.eq.s32.totalorder %s1914, 0
  %p1916 = pneg %p1915
  %1918 = shalt.err (%p1916)
  %s1919 = scalar_lea.sflag [#allocation3], 1
  %1920 = vsyncmov %s1919
  %s1921 = vpop.sfrf %1920
  %p1922 = scmp.eq.s32.totalorder %s1921, 0
  %p1923 = pneg %p1922
  %1925 = shalt.err (%p1923)

</llo_original>
